<compile_context>
chip_gen: v7x
topology: tpu7x:2x2x1
jax: 0.10.0
libtpu: 0.0.40
codegen_flags: <defaults>
</compile_context>

<pallas_src>
import jax
import jax.numpy as jnp
from jax import lax
from jax.experimental import pallas as pl
from jax.experimental.pallas import tpu as pltpu

B = 8           # graphs per batch
N = 64          # nodes per graph
F_IN = 32       # input feature dim
F_OUT = 16      # per-head hidden dim
NUM_HEADS = 2   # attention heads
EMB = NUM_HEADS * F_OUT
LEAKY_SLOPE = 0.2
NORM_EPS = 1e-12  # F.normalize eps


def gat_kernel(feats_ref, adj_ref, w_big_ref, wa_dst_ref, out_ref):
    feats = feats_ref[0]                       # [N, F_IN]
    adj = adj_ref[0]                           # [N, N]
    neg_big = jnp.float32(-1e9)

    # One fused MXU pass: per-head projections in head-concat lane order plus the
    # folded a_src columns at [:, EMB + h].
    proj = jnp.dot(feats, w_big_ref[...],
                   preferred_element_type=jnp.float32)            # [N, EMB + H]

    # Destination logits for all heads as [H, N] rows in one small MXU pass
    # (contraction handles the orientation; no XLU transpose of a column).
    e_dst_rows = jnp.einsum('hf,nf->hn', wa_dst_ref[...], feats,
                            preferred_element_type=jnp.float32)   # [H, N]

    # Lane-pack both heads' [N, N] logit matrices -> [N, H*N] = [64, 128] so the
    # elementwise/exp softmax phase runs on full 128-lane vregs.
    e = jnp.concatenate(
        [proj[:, EMB + h:EMB + h + 1] + e_dst_rows[h:h + 1, :]
         for h in range(NUM_HEADS)], axis=1)                      # [N, H*N]
    mask = jnp.concatenate([adj] * NUM_HEADS, axis=1) > 0         # [N, H*N]

    e = jnp.maximum(e, LEAKY_SLOPE * e)        # LeakyReLU (slope < 1)
    e = jnp.where(mask, e, neg_big)            # mask non-edges

    # Per-head row max (lane-half segment reduction), broadcast back packed.
    e_max = jnp.concatenate(
        [jnp.broadcast_to(
            jnp.max(e[:, h * N:(h + 1) * N], axis=-1, keepdims=True), (N, N))
         for h in range(NUM_HEADS)], axis=1)                      # [N, H*N]

    # Self-loops guarantee e_max is a real logit, so non-edge entries underflow
    # to exactly 0 here -- no maskf multiply needed.
    p = jnp.exp(e - e_max)                                        # [N, H*N]

    sumsq = jnp.zeros((N, 1), jnp.float32)
    for h in range(NUM_HEADS):                 # static unroll over heads
        ph = p[:, h * N:(h + 1) * N]                              # [N, N]
        hfeat = proj[:, h * F_OUT:(h + 1) * F_OUT]                # [N, F_OUT]
        denom = jnp.sum(ph, axis=-1, keepdims=True)               # [N, 1]
        inv_denom = pl.reciprocal(jnp.maximum(denom, jnp.float32(1e-20)),
                                  approx=True)                    # EUP, not VALU divide
        # Deferred normalization: un-normalized aggregate on the MXU, then scale
        # only the [N, F_OUT] result (row-wise scaling commutes through the dot).
        agg = jnp.dot(ph, hfeat, preferred_element_type=jnp.float32)
        agg = agg * inv_denom
        # ELU. TODO(synk): jnp.expm1 would avoid inf in the dead branch for a
        # future VJP; exp-1 kept for guaranteed Mosaic lowering (forward-identical).
        agg = jnp.where(agg > 0, agg, jnp.exp(agg) - 1.0)
        out_ref[0, :, h * F_OUT:(h + 1) * F_OUT] = agg            # direct write, no scratch
        sumsq = sumsq + jnp.sum(agg * agg, axis=-1, keepdims=True)

    # F.normalize(emb, dim=1): x * rsqrt(max(sum x^2, eps^2)) == x / max(||x||, eps)
    inv_norm = lax.rsqrt(jnp.maximum(sumsq, jnp.float32(NORM_EPS * NORM_EPS)))
    out_ref[0] = out_ref[0] * inv_norm


def gnn_model_forward(feats, adj, w, a_src, a_dst):
    # Tiny host/XLA-side parameter folding (done once, outside the kernel):
    #   W_big[:, h*F_OUT:(h+1)*F_OUT] = W[h]
    #   W_big[:, EMB + h]             = W[h] @ a_src[h]^T
    #   wa_dst[h, :]                  = a_dst[h] @ W[h]^T
    b = feats.shape[0]
    w_all = jnp.transpose(w, (1, 0, 2)).reshape(F_IN, EMB)        # [F_IN, EMB]
    wa_src = jnp.einsum('hio,ho->ih', w, a_src[:, 0, :])          # [F_IN, H]
    w_big = jnp.concatenate([w_all, wa_src], axis=1)              # [F_IN, EMB + H]
    wa_dst = jnp.einsum('hio,ho->hi', w, a_dst[:, 0, :])          # [H, F_IN]

    return pl.pallas_call(
        gat_kernel,
        out_shape=jax.ShapeDtypeStruct((b, N, EMB), jnp.float32),
        grid=(b,),
        in_specs=[
            pl.BlockSpec((1, N, F_IN), lambda i: (i, 0, 0)),
            pl.BlockSpec((1, N, N), lambda i: (i, 0, 0)),
            pl.BlockSpec((F_IN, EMB + NUM_HEADS), lambda i: (0, 0)),
            pl.BlockSpec((NUM_HEADS, F_IN), lambda i: (0, 0)),
        ],
        out_specs=pl.BlockSpec((1, N, EMB), lambda i: (i, 0, 0)),
        compiler_params=pltpu.CompilerParams(
            dimension_semantics=("parallel",)),
    )(feats, adj, w_big, wa_dst)


def reference_forward_single(feats, adj, w, a_src, a_dst):
    outs = []
    for h in range(NUM_HEADS):
        hf = feats @ w[h]
        e = (jnp.sum(hf * a_src[h], -1, keepdims=True)
             + jnp.sum(hf * a_dst[h], -1, keepdims=True).T)
        e = jnp.where(e > 0, e, LEAKY_SLOPE * e)
        e = jnp.where(adj > 0, e, -1e9)
        p = jnp.exp(e - jnp.max(e, -1, keepdims=True)) * (adj > 0)
        alpha = p / jnp.maximum(jnp.sum(p, -1, keepdims=True), 1e-20)
        agg = alpha @ hf
        outs.append(jnp.where(agg > 0, agg, jnp.exp(agg) - 1.0))
    emb = jnp.concatenate(outs, -1)
    nrm = jnp.sqrt(jnp.sum(emb * emb, -1, keepdims=True))
    return emb / jnp.maximum(nrm, NORM_EPS)


if __name__ == "__main__":
    key = jax.random.PRNGKey(0)
    k_feat, k_adj, k_w, k_as, k_ad = jax.random.split(key, 5)

    feats = jax.random.normal(k_feat, (B, N, F_IN), dtype=jnp.float32)

    # deterministic sparse adjacency per graph with self-loops
    adj = (jax.random.uniform(k_adj, (B, N, N)) < 0.15).astype(jnp.float32)
    adj = jnp.maximum(adj, jnp.eye(N, dtype=jnp.float32)[None])

    # deterministic parameter init (Glorot-ish scaling)
    w = jax.random.normal(k_w, (NUM_HEADS, F_IN, F_OUT), dtype=jnp.float32) * (1.0 / jnp.sqrt(F_IN))
    a_src = jax.random.normal(k_as, (NUM_HEADS, 1, F_OUT), dtype=jnp.float32) * (1.0 / jnp.sqrt(F_OUT))
    a_dst = jax.random.normal(k_ad, (NUM_HEADS, 1, F_OUT), dtype=jnp.float32) * (1.0 / jnp.sqrt(F_OUT))

    out = gnn_model_forward(feats, adj, w, a_src, a_dst)
    out = jax.block_until_ready(out)

    ref = jax.vmap(lambda f, a: reference_forward_single(f, a, w, a_src, a_dst))(feats, adj)
    assert out.shape == (B, N, EMB)
    # tolerance loosened slightly: pl.reciprocal(approx=True) / lax.rsqrt introduce
    # small numeric drift vs the exact-divide JAX reference.
    assert jnp.allclose(out, ref, atol=5e-3, rtol=5e-3), "mismatch vs JAX reference"

    print("KERNEL_OK")
</pallas_src>

<mosaic_0001>
module attributes {stable_mosaic.version = 11 : i64} {
  func.func @gat_kernel(%arg0: i32, %arg1: memref<1x64x32xf32, #tpu.memory_space<vmem>>, %arg2: memref<1x64x64xf32, #tpu.memory_space<vmem>>, %arg3: memref<32x34xf32, #tpu.memory_space<vmem>>, %arg4: memref<2x32xf32, #tpu.memory_space<vmem>>, %arg5: memref<1x64x32xf32, #tpu.memory_space<vmem>>) attributes {dimension_semantics = [#tpu.dimension_semantics<parallel>], iteration_bounds = array<i64: 8>, scalar_prefetch = 0 : i64, scratch_operands = 0 : i64, tpu.core_type = #tpu.core_type<tc>, window_params = [{transform_indices = @transform_0, window_bounds = array<i64: 1, 64, 32>}, {transform_indices = @transform_1, window_bounds = array<i64: 1, 64, 64>}, {pipeline_mode = #tpu.pipeline_mode<synchronous>, transform_indices = @transform_2, window_bounds = array<i64: 32, 34>}, {pipeline_mode = #tpu.pipeline_mode<synchronous>, transform_indices = @transform_3, window_bounds = array<i64: 2, 32>}, {transform_indices = @transform_4, window_bounds = array<i64: 1, 64, 32>}]} {
    %c0 = arith.constant 0 : index
    %c0_0 = arith.constant 0 : index
    %c0_1 = arith.constant 0 : index
    %0 = vector.load %arg1[%c0, %c0_0, %c0_1] : memref<1x64x32xf32, #tpu.memory_space<vmem>>, vector<1x64x32xf32>
    %1 = vector.shape_cast %0 : vector<1x64x32xf32> to vector<64x32xf32>
    %c0_2 = arith.constant 0 : index
    %c0_3 = arith.constant 0 : index
    %c0_4 = arith.constant 0 : index
    %2 = vector.load %arg2[%c0_2, %c0_3, %c0_4] : memref<1x64x64xf32, #tpu.memory_space<vmem>>, vector<1x64x64xf32>
    %3 = vector.shape_cast %2 : vector<1x64x64xf32> to vector<64x64xf32>
    %c0_5 = arith.constant 0 : index
    %c0_6 = arith.constant 0 : index
    %4 = vector.load %arg3[%c0_5, %c0_6] : memref<32x34xf32, #tpu.memory_space<vmem>>, vector<32x34xf32>
    %cst = arith.constant dense<0.000000e+00> : vector<64x34xf32>
    %5 = tpu.matmul %1, %4, %cst {dimension_numbers = #tpu.dot_dimension_numbers<[1], [0], [0], [1], [0, 0, 1, 1], [], []>} : vector<64x32xf32>, vector<32x34xf32>, vector<64x34xf32> -> vector<64x34xf32>
    %c0_7 = arith.constant 0 : index
    %c0_8 = arith.constant 0 : index
    %6 = vector.load %arg4[%c0_7, %c0_8] : memref<2x32xf32, #tpu.memory_space<vmem>>, vector<2x32xf32>
    "tpu.trace_start"() <{level = 10 : i32, message = "hf,nf->hn"}> : () -> ()
    %cst_9 = arith.constant dense<0.000000e+00> : vector<2x64xf32>
    %7 = tpu.matmul %6, %1, %cst_9 {dimension_numbers = #tpu.dot_dimension_numbers<[1], [1], [0], [0], [0, 0, 1, 0], [], []>} : vector<2x32xf32>, vector<64x32xf32>, vector<2x64xf32> -> vector<2x64xf32>
    "tpu.trace_stop"() : () -> ()
    %8 = vector.extract_strided_slice %5 {offsets = [0, 32], sizes = [64, 1], strides = [1, 1]} : vector<64x34xf32> to vector<64x1xf32>
    %9 = vector.extract_strided_slice %7 {offsets = [0, 0], sizes = [1, 64], strides = [1, 1]} : vector<2x64xf32> to vector<1x64xf32>
    %10 = vector.broadcast %8 : vector<64x1xf32> to vector<64x64xf32>
    %11 = vector.broadcast %9 : vector<1x64xf32> to vector<64x64xf32>
    %12 = arith.addf %10, %11 : vector<64x64xf32>
    %13 = vector.extract_strided_slice %5 {offsets = [0, 33], sizes = [64, 1], strides = [1, 1]} : vector<64x34xf32> to vector<64x1xf32>
    %14 = vector.extract_strided_slice %7 {offsets = [1, 0], sizes = [1, 64], strides = [1, 1]} : vector<2x64xf32> to vector<1x64xf32>
    %15 = vector.broadcast %13 : vector<64x1xf32> to vector<64x64xf32>
    %16 = vector.broadcast %14 : vector<1x64xf32> to vector<64x64xf32>
    %17 = arith.addf %15, %16 : vector<64x64xf32>
    %18 = tpu.concatenate %12, %17 in 1 : vector<64x64xf32>, vector<64x64xf32> -> vector<64x128xf32>
    %19 = tpu.concatenate %3, %3 in 1 : vector<64x64xf32>, vector<64x64xf32> -> vector<64x128xf32>
    %cst_10 = arith.constant 0.000000e+00 : f32
    %20 = vector.broadcast %cst_10 : f32 to vector<64x128xf32>
    %21 = arith.cmpf ogt, %19, %20 : vector<64x128xf32>
    %cst_11 = arith.constant 2.000000e-01 : f32
    %22 = vector.broadcast %cst_11 : f32 to vector<64x128xf32>
    %23 = arith.mulf %22, %18 : vector<64x128xf32>
    %24 = arith.maximumf %18, %23 : vector<64x128xf32>
    %cst_12 = arith.constant -1.000000e+09 : f32
    %25 = vector.broadcast %cst_12 : f32 to vector<64x128xf32>
    %26 = arith.select %21, %24, %25 : vector<64x128xi1>, vector<64x128xf32>
    %27 = vector.extract_strided_slice %26 {offsets = [0, 0], sizes = [64, 64], strides = [1, 1]} : vector<64x128xf32> to vector<64x64xf32>
    %cst_13 = arith.constant dense<0xFF800000> : vector<64xf32>
    %28 = vector.multi_reduction <maximumf>, %27, %cst_13 [1] : vector<64x64xf32> to vector<64xf32>
    %29 = vector.shape_cast %28 : vector<64xf32> to vector<64x1xf32>
    %30 = vector.shape_cast %29 : vector<64x1xf32> to vector<64x1xf32>
    %31 = vector.broadcast %30 : vector<64x1xf32> to vector<64x64xf32>
    %32 = vector.extract_strided_slice %26 {offsets = [0, 64], sizes = [64, 64], strides = [1, 1]} : vector<64x128xf32> to vector<64x64xf32>
    %cst_14 = arith.constant dense<0xFF800000> : vector<64xf32>
    %33 = vector.multi_reduction <maximumf>, %32, %cst_14 [1] : vector<64x64xf32> to vector<64xf32>
    %34 = vector.shape_cast %33 : vector<64xf32> to vector<64x1xf32>
    %35 = vector.shape_cast %34 : vector<64x1xf32> to vector<64x1xf32>
    %36 = vector.broadcast %35 : vector<64x1xf32> to vector<64x64xf32>
    %37 = tpu.concatenate %31, %36 in 1 : vector<64x64xf32>, vector<64x64xf32> -> vector<64x128xf32>
    %38 = arith.subf %26, %37 : vector<64x128xf32>
    %39 = math.exp %38 : vector<64x128xf32>
    %cst_15 = arith.constant 0.000000e+00 : f32
    %40 = vector.broadcast %cst_15 : f32 to vector<64x1xf32>
    %41 = vector.extract_strided_slice %39 {offsets = [0, 0], sizes = [64, 64], strides = [1, 1]} : vector<64x128xf32> to vector<64x64xf32>
    %42 = vector.extract_strided_slice %5 {offsets = [0, 0], sizes = [64, 16], strides = [1, 1]} : vector<64x34xf32> to vector<64x16xf32>
    %cst_16 = arith.constant dense<0.000000e+00> : vector<64xf32>
    %43 = vector.multi_reduction <add>, %41, %cst_16 [1] : vector<64x64xf32> to vector<64xf32>
    %44 = vector.shape_cast %43 : vector<64xf32> to vector<64x1xf32>
    %cst_17 = arith.constant 9.99999968E-21 : f32
    %45 = vector.broadcast %cst_17 : f32 to vector<64x1xf32>
    %46 = arith.maximumf %44, %45 : vector<64x1xf32>
    %47 = tpu.reciprocal %46 {approx = true} : vector<64x1xf32> -> vector<64x1xf32>
    %cst_18 = arith.constant dense<0.000000e+00> : vector<64x16xf32>
    %48 = tpu.matmul %41, %42, %cst_18 {dimension_numbers = #tpu.dot_dimension_numbers<[1], [0], [0], [1], [0, 0, 1, 1], [], []>} : vector<64x64xf32>, vector<64x16xf32>, vector<64x16xf32> -> vector<64x16xf32>
    %49 = vector.broadcast %47 : vector<64x1xf32> to vector<64x16xf32>
    %50 = arith.mulf %48, %49 : vector<64x16xf32>
    %cst_19 = arith.constant 0.000000e+00 : f32
    %51 = vector.broadcast %cst_19 : f32 to vector<64x16xf32>
    %52 = arith.cmpf ogt, %50, %51 : vector<64x16xf32>
    %53 = math.exp %50 : vector<64x16xf32>
    %cst_20 = arith.constant 1.000000e+00 : f32
    %54 = vector.broadcast %cst_20 : f32 to vector<64x16xf32>
    %55 = arith.subf %53, %54 : vector<64x16xf32>
    %56 = arith.select %52, %50, %55 : vector<64x16xi1>, vector<64x16xf32>
    %c0_21 = arith.constant 0 : index
    %c0_22 = arith.constant 0 : index
    %c0_23 = arith.constant 0 : index
    %57 = vector.load %arg5[%c0_21, %c0_22, %c0_23] : memref<1x64x32xf32, #tpu.memory_space<vmem>>, vector<1x64x16xf32>
    %58 = vector.shape_cast %57 : vector<1x64x16xf32> to vector<64x16xf32>
    %59 = vector.shape_cast %56 : vector<64x16xf32> to vector<1x64x16xf32>
    tpu.vector_store %arg5[%c0_21, %c0_22, %c0_23], %59 {strides = array<i32>} : memref<1x64x32xf32, #tpu.memory_space<vmem>>, vector<1x64x16xf32>,
    %60 = arith.mulf %56, %56 : vector<64x16xf32>
    %cst_24 = arith.constant dense<0.000000e+00> : vector<64xf32>
    %61 = vector.multi_reduction <add>, %60, %cst_24 [1] : vector<64x16xf32> to vector<64xf32>
    %62 = vector.shape_cast %61 : vector<64xf32> to vector<64x1xf32>
    %63 = arith.addf %40, %62 : vector<64x1xf32>
    %64 = vector.extract_strided_slice %39 {offsets = [0, 64], sizes = [64, 64], strides = [1, 1]} : vector<64x128xf32> to vector<64x64xf32>
    %65 = vector.extract_strided_slice %5 {offsets = [0, 16], sizes = [64, 16], strides = [1, 1]} : vector<64x34xf32> to vector<64x16xf32>
    %cst_25 = arith.constant dense<0.000000e+00> : vector<64xf32>
    %66 = vector.multi_reduction <add>, %64, %cst_25 [1] : vector<64x64xf32> to vector<64xf32>
    %67 = vector.shape_cast %66 : vector<64xf32> to vector<64x1xf32>
    %cst_26 = arith.constant 9.99999968E-21 : f32
    %68 = vector.broadcast %cst_26 : f32 to vector<64x1xf32>
    %69 = arith.maximumf %67, %68 : vector<64x1xf32>
    %70 = tpu.reciprocal %69 {approx = true} : vector<64x1xf32> -> vector<64x1xf32>
    %cst_27 = arith.constant dense<0.000000e+00> : vector<64x16xf32>
    %71 = tpu.matmul %64, %65, %cst_27 {dimension_numbers = #tpu.dot_dimension_numbers<[1], [0], [0], [1], [0, 0, 1, 1], [], []>} : vector<64x64xf32>, vector<64x16xf32>, vector<64x16xf32> -> vector<64x16xf32>
    %72 = vector.broadcast %70 : vector<64x1xf32> to vector<64x16xf32>
    %73 = arith.mulf %71, %72 : vector<64x16xf32>
    %cst_28 = arith.constant 0.000000e+00 : f32
    %74 = vector.broadcast %cst_28 : f32 to vector<64x16xf32>
    %75 = arith.cmpf ogt, %73, %74 : vector<64x16xf32>
    %76 = math.exp %73 : vector<64x16xf32>
    %cst_29 = arith.constant 1.000000e+00 : f32
    %77 = vector.broadcast %cst_29 : f32 to vector<64x16xf32>
    %78 = arith.subf %76, %77 : vector<64x16xf32>
    %79 = arith.select %75, %73, %78 : vector<64x16xi1>, vector<64x16xf32>
    %c0_30 = arith.constant 0 : index
    %c0_31 = arith.constant 0 : index
    %c16 = arith.constant 16 : index
    %80 = vector.load %arg5[%c0_30, %c0_31, %c16] : memref<1x64x32xf32, #tpu.memory_space<vmem>>, vector<1x64x16xf32>
    %81 = vector.shape_cast %80 : vector<1x64x16xf32> to vector<64x16xf32>
    %82 = vector.shape_cast %79 : vector<64x16xf32> to vector<1x64x16xf32>
    tpu.vector_store %arg5[%c0_30, %c0_31, %c16], %82 {strides = array<i32>} : memref<1x64x32xf32, #tpu.memory_space<vmem>>, vector<1x64x16xf32>,
    %83 = arith.mulf %79, %79 : vector<64x16xf32>
    %cst_32 = arith.constant dense<0.000000e+00> : vector<64xf32>
    %84 = vector.multi_reduction <add>, %83, %cst_32 [1] : vector<64x16xf32> to vector<64xf32>
    %85 = vector.shape_cast %84 : vector<64xf32> to vector<64x1xf32>
    %86 = arith.addf %63, %85 : vector<64x1xf32>
    %cst_33 = arith.constant 1.000000e-24 : f32
    %87 = vector.broadcast %cst_33 : f32 to vector<64x1xf32>
    %88 = arith.maximumf %86, %87 : vector<64x1xf32>
    %89 = math.rsqrt %88 : vector<64x1xf32>
    %c0_34 = arith.constant 0 : index
    %c0_35 = arith.constant 0 : index
    %c0_36 = arith.constant 0 : index
    %90 = vector.load %arg5[%c0_34, %c0_35, %c0_36] : memref<1x64x32xf32, #tpu.memory_space<vmem>>, vector<1x64x32xf32>
    %91 = vector.shape_cast %90 : vector<1x64x32xf32> to vector<64x32xf32>
    %92 = vector.broadcast %89 : vector<64x1xf32> to vector<64x32xf32>
    %93 = arith.mulf %91, %92 : vector<64x32xf32>
    %c0_37 = arith.constant 0 : index
    %c0_38 = arith.constant 0 : index
    %c0_39 = arith.constant 0 : index
    %94 = vector.load %arg5[%c0_37, %c0_38, %c0_39] : memref<1x64x32xf32, #tpu.memory_space<vmem>>, vector<1x64x32xf32>
    %95 = vector.shape_cast %94 : vector<1x64x32xf32> to vector<64x32xf32>
    %96 = vector.shape_cast %93 : vector<64x32xf32> to vector<1x64x32xf32>
    tpu.vector_store %arg5[%c0_37, %c0_38, %c0_39], %96 {strides = array<i32>} : memref<1x64x32xf32, #tpu.memory_space<vmem>>, vector<1x64x32xf32>,
    return
  }
  func.func @transform_0(%arg0: i32) -> (i32, i32, i32) {
    %c0_i32 = arith.constant 0 : i32
    %c0_i32_0 = arith.constant 0 : i32
    %c0_i32_1 = arith.constant 0 : i32
    return %arg0, %c0_i32, %c0_i32_0 : i32, i32, i32
  }
  func.func @transform_1(%arg0: i32) -> (i32, i32, i32) {
    %c0_i32 = arith.constant 0 : i32
    %c0_i32_0 = arith.constant 0 : i32
    %c0_i32_1 = arith.constant 0 : i32
    return %arg0, %c0_i32, %c0_i32_0 : i32, i32, i32
  }
  func.func @transform_2(%arg0: i32) -> (i32, i32) {
    %c0_i32 = arith.constant 0 : i32
    %c0_i32_0 = arith.constant 0 : i32
    %c0_i32_1 = arith.constant 0 : i32
    return %c0_i32, %c0_i32_0 : i32, i32
  }
  func.func @transform_3(%arg0: i32) -> (i32, i32) {
    %c0_i32 = arith.constant 0 : i32
    %c0_i32_0 = arith.constant 0 : i32
    %c0_i32_1 = arith.constant 0 : i32
    return %c0_i32, %c0_i32_0 : i32, i32
  }
  func.func @transform_4(%arg0: i32) -> (i32, i32, i32) {
    %c0_i32 = arith.constant 0 : i32
    %c0_i32_0 = arith.constant 0 : i32
    %c0_i32_1 = arith.constant 0 : i32
    return %arg0, %c0_i32, %c0_i32_0 : i32, i32, i32
  }
}

</mosaic_0001>

<llo_original>
// kernel: tpu_custom_call.1
$region0: #{tpu_custom_call.1}
  #allocation0 [shape = 'u32[]', space=smem, size = 0x4, offset = 0x4, fixed_abs, tag = 'smem constant byte address 0x4 - core index']
  #allocation1 [shape = 'u32[144,128]{1,0:T(1,128)}', space=vmem, size = 0x12000, scoped, tag = 'internal scratch']
  %s0 = inlined_call_operand.vmem [shape: f32[8,64,32], index: 0, kind: input, shape index: {}]
  %s1 = inlined_call_operand.vmem [shape: f32[8,64,64], index: 1, kind: input, shape index: {}]
  %s2 = inlined_call_operand.vmem [shape: f32[32,34], index: 2, kind: input, shape index: {}]
  %s3 = inlined_call_operand.vmem [shape: f32[2,32], index: 3, kind: input, shape index: {}]
  %s4 = inlined_call_operand.vmem [shape: f32[8,64,32], index: 4, kind: output, shape index: {}]
  %s5 = sld [smem:[#allocation0]]
  $region49: #{tpu_custom_call.1} parent=0
    _
  %s7 = ssub.s32 1, %s5
  %s8 = scalar_select 0, %s7, %s5
  loop: start=0, step=1, limit=10
  $region2: #{tpu_custom_call.1} parent=0 // loop_pre_header
    _
  $region3: #{tpu_custom_call.1} parent=0 // loop_header
    %s10 = sphi 0, %s14
    %p11 = scmp.ge.s32.totalorder %s10, 10
    %s20 = sphi 0, %s22
    %s23 = sphi 0, %s20
    %s24 = sphi 0, %s23
    %s40 = sphi 0, %s24
    %s46 = sphi 0, %s48
    %s49 = sphi 0, %s46
    %s50 = sphi 0, %s49
    %s66 = sphi 0, %s50
    %s70 = sphi 0, %s70
    %s72 = sphi 0, %s70
    %s73 = sphi 0, %s72
    %s87 = sphi 0, %s73
    %s91 = sphi 0, %s91
    %s93 = sphi 0, %s91
    %s94 = sphi 0, %s93
    %s108 = sphi 0, %s94
    %s114 = sphi 0, %s116
    %s117 = sphi 0, %s114
    %s118 = sphi 0, %s117
    %s134 = sphi 0, %s118
  $region4: #{tpu_custom_call.1} parent=0 // loop_header_branch
    %13 = sbr.rel (%p11) target = $region8
  $region5: #{tpu_custom_call.1} parent=0 // loop_body
    %s15 = ssub.s32 %s10, 1
    %s16 = ssub.s32 %s10, 2
    %s17 = sadd.s32 %s10, 1
    %s18 = ssub.s32 %s10, %s17
    %p19 = scmp.eq.s32.totalorder %s18, 0
    %s21 = sadd.s32 %s20, 1
    %s22 = scalar_select %p19, %s20, %s21
    %p25 = pneg %p19
    %p26 = scmp.eq.s32.totalorder %s10, 7
    %p27 = por %p25, %p26
    %p28 = scmp.ne.s32.totalorder %s20, %s23
    %p29 = scmp.eq.s32.totalorder %s10, 0
    %p30 = por %p28, %p29
    %p31 = scmp.ne.s32.totalorder %s20, %s23
    %p32 = scmp.eq.s32.totalorder %s15, 7
    %p33 = por %p31, %p32
    %p34 = scmp.ne.s32.totalorder %s23, %s24
    %p35 = scmp.eq.s32.totalorder %s15, 0
    %p36 = por %p34, %p35
    %p37 = scmp.ne.s32.totalorder %s23, %s24
    %p38 = scmp.eq.s32.totalorder %s16, 7
    %p39 = por %p37, %p38
    %p41 = scmp.ne.s32.totalorder %s24, %s40
    %p42 = scmp.eq.s32.totalorder %s16, 0
    %p43 = por %p41, %p42
    %s44 = ssub.s32 %s10, %s17
    %p45 = scmp.eq.s32.totalorder %s44, 0
    %s47 = sadd.s32 %s46, 1
    %s48 = scalar_select %p45, %s46, %s47
    %p51 = pneg %p45
    %p52 = scmp.eq.s32.totalorder %s10, 7
    %p53 = por %p51, %p52
    %p54 = scmp.ne.s32.totalorder %s46, %s49
    %p55 = scmp.eq.s32.totalorder %s10, 0
    %p56 = por %p54, %p55
    %p57 = scmp.ne.s32.totalorder %s46, %s49
    %p58 = scmp.eq.s32.totalorder %s15, 7
    %p59 = por %p57, %p58
    %p60 = scmp.ne.s32.totalorder %s49, %s50
    %p61 = scmp.eq.s32.totalorder %s15, 0
    %p62 = por %p60, %p61
    %p63 = scmp.ne.s32.totalorder %s49, %s50
    %p64 = scmp.eq.s32.totalorder %s16, 7
    %p65 = por %p63, %p64
    %p67 = scmp.ne.s32.totalorder %s50, %s66
    %p68 = scmp.eq.s32.totalorder %s16, 0
    %p69 = por %p67, %p68
    %s71 = sadd.s32 %s70, 1
    %p74 = scmp.eq.s32.totalorder %s10, 7
    %p75 = scmp.ne.s32.totalorder %s70, %s72
    %p76 = scmp.eq.s32.totalorder %s10, 0
    %p77 = por %p75, %p76
    %p78 = scmp.ne.s32.totalorder %s70, %s72
    %p79 = scmp.eq.s32.totalorder %s15, 7
    %p80 = por %p78, %p79
    %p81 = scmp.ne.s32.totalorder %s72, %s73
    %p82 = scmp.eq.s32.totalorder %s15, 0
    %p83 = por %p81, %p82
    %p84 = scmp.ne.s32.totalorder %s72, %s73
    %p85 = scmp.eq.s32.totalorder %s16, 7
    %p86 = por %p84, %p85
    %p88 = scmp.ne.s32.totalorder %s73, %s87
    %p89 = scmp.eq.s32.totalorder %s16, 0
    %p90 = por %p88, %p89
    %s92 = sadd.s32 %s91, 1
    %p95 = scmp.eq.s32.totalorder %s10, 7
    %p96 = scmp.ne.s32.totalorder %s91, %s93
    %p97 = scmp.eq.s32.totalorder %s10, 0
    %p98 = por %p96, %p97
    %p99 = scmp.ne.s32.totalorder %s91, %s93
    %p100 = scmp.eq.s32.totalorder %s15, 7
    %p101 = por %p99, %p100
    %p102 = scmp.ne.s32.totalorder %s93, %s94
    %p103 = scmp.eq.s32.totalorder %s15, 0
    %p104 = por %p102, %p103
    %p105 = scmp.ne.s32.totalorder %s93, %s94
    %p106 = scmp.eq.s32.totalorder %s16, 7
    %p107 = por %p105, %p106
    %p109 = scmp.ne.s32.totalorder %s94, %s108
    %p110 = scmp.eq.s32.totalorder %s16, 0
    %p111 = por %p109, %p110
    %s112 = ssub.s32 %s10, %s17
    %p113 = scmp.eq.s32.totalorder %s112, 0
    %s115 = sadd.s32 %s114, 1
    %s116 = scalar_select %p113, %s114, %s115
    %p119 = pneg %p113
    %p120 = scmp.eq.s32.totalorder %s10, 7
    %p121 = por %p119, %p120
    %p122 = scmp.ne.s32.totalorder %s114, %s117
    %p123 = scmp.eq.s32.totalorder %s10, 0
    %p124 = por %p122, %p123
    %p125 = scmp.ne.s32.totalorder %s114, %s117
    %p126 = scmp.eq.s32.totalorder %s15, 7
    %p127 = por %p125, %p126
    %p128 = scmp.ne.s32.totalorder %s117, %s118
    %p129 = scmp.eq.s32.totalorder %s15, 0
    %p130 = por %p128, %p129
    %p131 = scmp.ne.s32.totalorder %s117, %s118
    %p132 = scmp.eq.s32.totalorder %s16, 7
    %p133 = por %p131, %p132
    %p135 = scmp.ne.s32.totalorder %s118, %s134
    %p136 = scmp.eq.s32.totalorder %s16, 0
    %p137 = por %p135, %p136
    %p138 = scmp.le.s32.totalorder 1, %s10
    %p139 = scmp.lt.s32.totalorder %s10, 9
    %p140 = pnand %p138, %p139
    %p141 = pneg %p140
    // Predicated region
    $region9: #{tpu_custom_call.1} parent=5 // pred_check
      _
    $region10: #{tpu_custom_call.1} parent=5 // pred_check_branch
      %143 = sbr.rel (%p140) target = $region12
    $region11: #{tpu_custom_call.1} parent=5 // pred_region
      %s144 = ssub.s32 %s10, 1
      // Predicated region
      $region13: #{tpu_custom_call.1} parent=11 // pred_check
        %p145 = pneg %p83
      $region14: #{tpu_custom_call.1} parent=11 // pred_check_branch
        %147 = sbr.rel (%p145) target = $region16
      $region15: #{tpu_custom_call.1} parent=11 // pred_region
        _
      $region16: #{tpu_custom_call.1} parent=11 // pred_fallthru
        _
      // Predicated region
      $region17: #{tpu_custom_call.1} parent=11 // pred_check
        %p148 = pneg %p104
      $region18: #{tpu_custom_call.1} parent=11 // pred_check_branch
        %150 = sbr.rel (%p148) target = $region20
      $region19: #{tpu_custom_call.1} parent=11 // pred_region
        _
      $region20: #{tpu_custom_call.1} parent=11 // pred_fallthru
        _
    $region12: #{tpu_custom_call.1} parent=5 // pred_fallthru
      _
    %p151 = scmp.lt.s32.totalorder %s10, 8
    // Predicated region
    $region21: #{tpu_custom_call.1} parent=5 // pred_check
      %p152 = pneg %p151
    $region22: #{tpu_custom_call.1} parent=5 // pred_check_branch
      %154 = sbr.rel (%p152) target = $region24
    $region23: #{tpu_custom_call.1} parent=5 // pred_region
      // Predicated region
      $region25: #{tpu_custom_call.1} parent=23 // pred_check
        %p155 = pneg %p30
      $region26: #{tpu_custom_call.1} parent=23 // pred_check_branch
        %157 = sbr.rel (%p155) target = $region28
      $region27: #{tpu_custom_call.1} parent=23 // pred_region
        %p158 = scmp.lt.s32.totalorder %s10, 7
        %s159 = scalar_select %p158, %s10, 7
        %s160 = smul.addr %s159, 8
        %s161 = smul.addr %s160, 8
        %s162 = scalar_lea.vmem %s0, %s161
      $region28: #{tpu_custom_call.1} parent=23 // pred_fallthru
        _
      // Predicated region
      $region29: #{tpu_custom_call.1} parent=23 // pred_check
        %p163 = pneg %p56
      $region30: #{tpu_custom_call.1} parent=23 // pred_check_branch
        %165 = sbr.rel (%p163) target = $region32
      $region31: #{tpu_custom_call.1} parent=23 // pred_region
        %p166 = scmp.lt.s32.totalorder %s10, 7
        %s167 = scalar_select %p166, %s10, 7
        %s168 = smul.addr %s167, 8
        %s169 = smul.addr %s168, 8
        %s170 = scalar_lea.vmem %s1, %s169
      $region32: #{tpu_custom_call.1} parent=23 // pred_fallthru
        _
    $region24: #{tpu_custom_call.1} parent=5 // pred_fallthru
      _
    %p171 = scmp.le.s32.totalorder 1, %s10
    %p172 = scmp.lt.s32.totalorder %s10, 9
    %p173 = pnand %p171, %p172
    %p174 = pneg %p173
    // Predicated region
    $region33: #{tpu_custom_call.1} parent=5 // pred_check
      _
    $region34: #{tpu_custom_call.1} parent=5 // pred_check_branch
      %176 = sbr.rel (%p173) target = $region36
    $region35: #{tpu_custom_call.1} parent=5 // pred_region
      %s177 = ssub.s32 %s10, 1
      %p178 = scmp.lt.s32.totalorder %s15, 7
      %s179 = scalar_select %p178, %s15, 7
      %s180 = smul.addr %s179, 8
      %s181 = smul.addr %s180, 8
      %s182 = scalar_lea.vmem %s0, %s181
      %p183 = pneg %p36
      %p184 = pneg %p33
      %p185 = scmp.lt.s32.totalorder %s15, 7
      %s186 = scalar_select %p185, %s15, 7
      %s187 = smul.addr %s186, 8
      %s188 = smul.addr %s187, 8
      %s189 = scalar_lea.vmem %s1, %s188
      %p190 = pneg %p62
      %p191 = pneg %p59
      %p192 = pneg %p83
      %p193 = pneg %p80
      %p194 = pneg %p104
      %p195 = pneg %p101
      %p196 = pneg %p130
      %p197 = pneg %p127
      %p198 = scmp.lt.s32.totalorder %s15, 7
      %s199 = scalar_select %p198, %s15, 7
      %s200 = smul.addr %s199, 8
      %s201 = smul.addr %s200, 8
      %s202 = scalar_lea.vmem %s4, %s201
      %p203 = scmp.lt.s32.totalorder %s15, 7
      %s204 = scalar_select %p203, %s15, 7
      %s205 = smul.addr %s204, 8
      %s206 = smul.addr %s205, 8
      %s207 = scalar_lea.vmem %s0, %s206
      %p208 = scmp.lt.s32.totalorder %s15, 7
      %s209 = scalar_select %p208, %s15, 7
      %s210 = smul.addr %s209, 8
      %s211 = smul.addr %s210, 8
      %s212 = scalar_lea.vmem %s1, %s211
      %p213 = scmp.lt.s32.totalorder %s15, 7
      %s214 = scalar_select %p213, %s15, 7
      %s215 = smul.addr %s214, 8
      %s216 = smul.addr %s215, 8
      %s217 = scalar_lea.vmem %s4, %s216
      %v218 = vld [vmem:[%s207] sm:$0xff]
      %v219 = vld [vmem:[%s207 + $0x8] sm:$0xff]
      %v220 = vld [vmem:[%s207 + $0x10] sm:$0xff]
      %v221 = vld [vmem:[%s207 + $0x18] sm:$0xff]
      %v222 = vld [vmem:[%s207 + $0x20] sm:$0xff]
      %v223 = vld [vmem:[%s207 + $0x28] sm:$0xff]
      %v224 = vld [vmem:[%s207 + $0x30] sm:$0xff]
      %v225 = vld [vmem:[%s207 + $0x38] sm:$0xff]
      %v226 = vld [vmem:[%s212] sm:$0xff]
      %v227 = vld [vmem:[%s212 + $0x8] sm:$0xff]
      %v228 = vld [vmem:[%s212 + $0x10] sm:$0xff]
      %v229 = vld [vmem:[%s212 + $0x18] sm:$0xff]
      %v230 = vld [vmem:[%s212 + $0x20] sm:$0xff]
      %v231 = vld [vmem:[%s212 + $0x28] sm:$0xff]
      %v232 = vld [vmem:[%s212 + $0x30] sm:$0xff]
      %v233 = vld [vmem:[%s212 + $0x38] sm:$0xff]
      %v234 = vld [vmem:[%s2] sm:$0xff]
      %v235 = vld [vmem:[%s2 + $0x8] sm:$0xff]
      %v236 = vld [vmem:[%s2 + $0x10] sm:$0xff]
      %v237 = vld [vmem:[%s2 + $0x18] sm:$0xff]
      %vm238 = vcmask 261120
      %v240 = vsel %vm238, %v218, 0
      %v243 = vsel %vm238, %v219, 0
      %v246 = vsel %vm238, %v220, 0
      %v249 = vsel %vm238, %v221, 0
      %v252 = vsel %vm238, %v222, 0
      %v255 = vsel %vm238, %v223, 0
      %v258 = vsel %vm238, %v224, 0
      %v261 = vsel %vm238, %v225, 0
      %263 = vmatprep.subr.mxu0 0.0
      %264 = vmatpush1.msra.mxu0 %v234
      %265 = vmatprep.subr.mxu0 0.0
      %266 = vmatpush1.msra.mxu0 %v235
      %267 = vmatprep.subr.mxu0 0.0
      %268 = vmatpush1.msra.mxu0 %v236
      %269 = vmatprep.subr.mxu0 0.0
      %270 = vmatpush1.msra.mxu0 %v237
      %271 = vmatprep.subr.mxu0 0.0
      %272 = vmatpush1.msra.mxu0 0.0
      %273 = vmatprep.subr.mxu0 0.0
      %274 = vmatpush1.msra.mxu0 0.0
      %275 = vmatprep.subr.mxu0 0.0
      %276 = vmatpush1.msra.mxu0 0.0
      %277 = vmatprep.subr.mxu0 0.0
      %278 = vmatpush1.msra.mxu0 0.0
      %279 = vmatprep.subr.mxu0 0.0
      %280 = vmatpush1.msra.mxu0 0.0
      %281 = vmatprep.subr.mxu0 0.0
      %282 = vmatpush1.msra.mxu0 0.0
      %283 = vmatprep.subr.mxu0 0.0
      %284 = vmatpush1.msra.mxu0 0.0
      %285 = vmatprep.subr.mxu0 0.0
      %286 = vmatpush1.msra.mxu0 0.0
      %287 = vmatprep.subr.mxu0 0.0
      %288 = vmatpush1.msra.mxu0 0.0
      %289 = vmatprep.subr.mxu0 0.0
      %290 = vmatpush1.msra.mxu0 0.0
      %291 = vmatprep.subr.mxu0 0.0
      %292 = vmatpush1.msra.mxu0 0.0
      %293 = vmatprep.subr.mxu0 0.0
      %294 = vmatpush1.msra.mxu0 0.0
      %295 = vmatprep.subr.mxu0 0.0
      %296 = vmatpush1.msra.mxu0 0.0
      %297 = vmatprep.subr.mxu0 0.0
      %298 = vmatpush1.msra.mxu0 0.0
      %299 = vmatprep.subr.mxu0 0.0
      %300 = vmatpush1.msra.mxu0 0.0
      %301 = vmatprep.subr.mxu0 0.0
      %302 = vmatpush1.msra.mxu0 0.0
      %303 = vmatprep.subr.mxu0 0.0
      %304 = vmatpush1.msra.mxu0 0.0
      %305 = vmatprep.subr.mxu0 0.0
      %306 = vmatpush1.msra.mxu0 0.0
      %307 = vmatprep.subr.mxu0 0.0
      %308 = vmatpush1.msra.mxu0 0.0
      %309 = vmatprep.subr.mxu0 0.0
      %310 = vmatpush1.msra.mxu0 0.0
      %311 = vmatprep.subr.mxu0 0.0
      %312 = vmatpush1.msra.mxu0 0.0
      %313 = vmatprep.subr.mxu0 0.0
      %314 = vmatpush1.msra.mxu0 0.0
      %315 = vmatprep.subr.mxu0 0.0
      %316 = vmatpush1.msra.mxu0 0.0
      %317 = vmatprep.subr.mxu0 0.0
      %318 = vmatpush1.msra.mxu0 0.0
      %319 = vmatprep.subr.mxu0 0.0
      %320 = vmatpush1.msra.mxu0 0.0
      %321 = vmatprep.subr.mxu0 0.0
      %322 = vmatpush1.msra.mxu0 0.0
      %323 = vmatprep.subr.mxu0 0.0
      %324 = vmatpush1.msra.mxu0 0.0
      %325 = vmatprep.subr.mxu0 0.0
      %326 = vmatpush1.msra.mxu0 0.0
      %327 = vmatprep.mubr.f32.mxu0 0.0
      %328 = vmatmul.mubr.f32.gmra.mrb[0].mxu0 %v240
      %v329 = vpop.f32.mrb[0].mxu0
      %v330 = vadd.f32 0.0, %v329
      %v331 = vpop.f32.mrb[0].mxu0
      %332 = vmatprep.mubr.f32.mxu0 0.0
      %333 = vmatmul.mubr.f32.gmra.mrb[0].mxu0 %v243
      %v334 = vpop.f32.mrb[0].mxu0
      %v335 = vadd.f32 0.0, %v334
      %v336 = vpop.f32.mrb[0].mxu0
      %337 = vmatprep.mubr.f32.mxu0 0.0
      %338 = vmatmul.mubr.f32.gmra.mrb[0].mxu0 %v246
      %v339 = vpop.f32.mrb[0].mxu0
      %v340 = vadd.f32 0.0, %v339
      %v341 = vpop.f32.mrb[0].mxu0
      %342 = vmatprep.mubr.f32.mxu0 0.0
      %343 = vmatmul.mubr.f32.gmra.mrb[0].mxu0 %v249
      %v344 = vpop.f32.mrb[0].mxu0
      %v345 = vadd.f32 0.0, %v344
      %v346 = vpop.f32.mrb[0].mxu0
      %347 = vmatprep.mubr.f32.mxu0 0.0
      %348 = vmatmul.mubr.f32.gmra.mrb[0].mxu0 %v252
      %v349 = vpop.f32.mrb[0].mxu0
      %v350 = vadd.f32 0.0, %v349
      %v351 = vpop.f32.mrb[0].mxu0
      %352 = vmatprep.mubr.f32.mxu0 0.0
      %353 = vmatmul.mubr.f32.gmra.mrb[0].mxu0 %v255
      %v354 = vpop.f32.mrb[0].mxu0
      %v355 = vadd.f32 0.0, %v354
      %v356 = vpop.f32.mrb[0].mxu0
      %357 = vmatprep.mubr.f32.mxu0 0.0
      %358 = vmatmul.mubr.f32.gmra.mrb[0].mxu0 %v258
      %v359 = vpop.f32.mrb[0].mxu0
      %v360 = vadd.f32 0.0, %v359
      %v361 = vpop.f32.mrb[0].mxu0
      %362 = vmatprep.mubr.f32.mxu0 0.0
      %363 = vmatmul.mubr.f32.gmra.mrb[0].mxu0 %v261
      %v364 = vpop.f32.mrb[0].mxu0
      %v365 = vadd.f32 0.0, %v364
      %v366 = vpop.f32.mrb[0].mxu0
      %367 = vdwg.mxu0
      %v368 = vld [vmem:[%s3] sm:$0x3]
      %v370 = vsel %vm238, %v368, 0
      %372 = vmatprep.subr.mxu0 0.0
      %373 = vmatpush1.xpose.msra.mxu0 %v240
      %374 = vmatprep.subr.mxu0 0.0
      %375 = vmatpush1.xpose.msra.mxu0 %v243
      %376 = vmatprep.subr.mxu0 0.0
      %377 = vmatpush1.xpose.msra.mxu0 %v246
      %378 = vmatprep.subr.mxu0 0.0
      %379 = vmatpush1.xpose.msra.mxu0 %v249
      %380 = vmatprep.subr.mxu0 0.0
      %381 = vmatpush1.xpose.msra.mxu0 %v252
      %382 = vmatprep.subr.mxu0 0.0
      %383 = vmatpush1.xpose.msra.mxu0 %v255
      %384 = vmatprep.subr.mxu0 0.0
      %385 = vmatpush1.xpose.msra.mxu0 %v258
      %386 = vmatprep.subr.mxu0 0.0
      %387 = vmatpush1.xpose.msra.mxu0 %v261
      %388 = vmatprep.subr.mxu0 0.0
      %389 = vmatpush1.xpose.msra.mxu0 0.0
      %390 = vmatprep.subr.mxu0 0.0
      %391 = vmatpush1.xpose.msra.mxu0 0.0
      %392 = vmatprep.subr.mxu0 0.0
      %393 = vmatpush1.xpose.msra.mxu0 0.0
      %394 = vmatprep.subr.mxu0 0.0
      %395 = vmatpush1.xpose.msra.mxu0 0.0
      %396 = vmatprep.subr.mxu0 0.0
      %397 = vmatpush1.xpose.msra.mxu0 0.0
      %398 = vmatprep.subr.mxu0 0.0
      %399 = vmatpush1.xpose.msra.mxu0 0.0
      %400 = vmatprep.subr.mxu0 0.0
      %401 = vmatpush1.xpose.msra.mxu0 0.0
      %402 = vmatprep.subr.mxu0 0.0
      %403 = vmatpush1.xpose.msra.mxu0 0.0
      %404 = vmatprep.subr.mxu0 0.0
      %405 = vmatpush1.xpose.msra.mxu0 0.0
      %406 = vmatprep.subr.mxu0 0.0
      %407 = vmatpush1.xpose.msra.mxu0 0.0
      %408 = vmatprep.subr.mxu0 0.0
      %409 = vmatpush1.xpose.msra.mxu0 0.0
      %410 = vmatprep.subr.mxu0 0.0
      %411 = vmatpush1.xpose.msra.mxu0 0.0
      %412 = vmatprep.subr.mxu0 0.0
      %413 = vmatpush1.xpose.msra.mxu0 0.0
      %414 = vmatprep.subr.mxu0 0.0
      %415 = vmatpush1.xpose.msra.mxu0 0.0
      %416 = vmatprep.subr.mxu0 0.0
      %417 = vmatpush1.xpose.msra.mxu0 0.0
      %418 = vmatprep.subr.mxu0 0.0
      %419 = vmatpush1.xpose.msra.mxu0 0.0
      %420 = vmatprep.subr.mxu0 0.0
      %421 = vmatpush1.xpose.msra.mxu0 0.0
      %422 = vmatprep.subr.mxu0 0.0
      %423 = vmatpush1.xpose.msra.mxu0 0.0
      %424 = vmatprep.subr.mxu0 0.0
      %425 = vmatpush1.xpose.msra.mxu0 0.0
      %426 = vmatprep.subr.mxu0 0.0
      %427 = vmatpush1.xpose.msra.mxu0 0.0
      %428 = vmatprep.subr.mxu0 0.0
      %429 = vmatpush1.xpose.msra.mxu0 0.0
      %430 = vmatprep.subr.mxu0 0.0
      %431 = vmatpush1.xpose.msra.mxu0 0.0
      %432 = vmatprep.subr.mxu0 0.0
      %433 = vmatpush1.xpose.msra.mxu0 0.0
      %434 = vmatprep.subr.mxu0 0.0
      %435 = vmatpush1.xpose.msra.mxu0 0.0
      %436 = vmatprep.mubr.f32.mxu0 0.0
      %437 = vmatmul.mubr.f32.gmra.mrb[0].mxu0 %v370
      %v438 = vpop.f32.mrb[0].mxu0
      %v439 = vadd.f32 0.0, %v438
      %v440 = vpop.f32.mrb[0].mxu0
      %441 = vdwg.mxu0
      %443 = vset.pattern.permute.xlu0 32
      %444 = vperm.xlu0 %443, %v330
      %v445 = vpop.permute.xlu0 %444
      %448 = vset.pattern.permute.xlu0 32
      %449 = vperm.xlu0 %448, %v335
      %v450 = vpop.permute.xlu0 %449
      %453 = vset.pattern.permute.xlu0 32
      %454 = vperm.xlu0 %453, %v340
      %v455 = vpop.permute.xlu0 %454
      %458 = vset.pattern.permute.xlu0 32
      %459 = vperm.xlu0 %458, %v345
      %v460 = vpop.permute.xlu0 %459
      %463 = vset.pattern.permute.xlu0 32
      %464 = vperm.xlu0 %463, %v350
      %v465 = vpop.permute.xlu0 %464
      %468 = vset.pattern.permute.xlu0 32
      %469 = vperm.xlu0 %468, %v355
      %v470 = vpop.permute.xlu0 %469
      %473 = vset.pattern.permute.xlu0 32
      %474 = vperm.xlu0 %473, %v360
      %v475 = vpop.permute.xlu0 %474
      %478 = vset.pattern.permute.xlu0 32
      %479 = vperm.xlu0 %478, %v365
      %v480 = vpop.permute.xlu0 %479
      %v482 = vlaneseq
      %v483 = vshrl.u32 %v482, 7
      %v484 = vsub.s32 0, %v483
      %v485 = vrot.slane %v439, %v484
      %v486 = vadd.f32 %v445, %v485
      %v487 = vadd.f32 %v450, %v485
      %v488 = vadd.f32 %v455, %v485
      %v489 = vadd.f32 %v460, %v485
      %v490 = vadd.f32 %v465, %v485
      %v491 = vadd.f32 %v470, %v485
      %v492 = vadd.f32 %v475, %v485
      %v493 = vadd.f32 %v480, %v485
      %494 = vset.pattern.permute.xlu0 33
      %495 = vperm.xlu0 %494, %v330
      %v496 = vpop.permute.xlu0 %495
      %498 = vset.pattern.permute.xlu0 33
      %499 = vperm.xlu0 %498, %v335
      %v500 = vpop.permute.xlu0 %499
      %502 = vset.pattern.permute.xlu0 33
      %503 = vperm.xlu0 %502, %v340
      %v504 = vpop.permute.xlu0 %503
      %506 = vset.pattern.permute.xlu0 33
      %507 = vperm.xlu0 %506, %v345
      %v508 = vpop.permute.xlu0 %507
      %510 = vset.pattern.permute.xlu0 33
      %511 = vperm.xlu0 %510, %v350
      %v512 = vpop.permute.xlu0 %511
      %514 = vset.pattern.permute.xlu0 33
      %515 = vperm.xlu0 %514, %v355
      %v516 = vpop.permute.xlu0 %515
      %518 = vset.pattern.permute.xlu0 33
      %519 = vperm.xlu0 %518, %v360
      %v520 = vpop.permute.xlu0 %519
      %522 = vset.pattern.permute.xlu0 33
      %523 = vperm.xlu0 %522, %v365
      %v524 = vpop.permute.xlu0 %523
      %v526 = vlaneseq
      %v527 = vshrl.u32 %v526, 7
      %v528 = vsub.s32 1, %v527
      %v529 = vrot.slane %v439, %v528
      %v530 = vadd.f32 %v496, %v529
      %v531 = vadd.f32 %v500, %v529
      %v532 = vadd.f32 %v504, %v529
      %v533 = vadd.f32 %v508, %v529
      %v534 = vadd.f32 %v512, %v529
      %v535 = vadd.f32 %v516, %v529
      %v536 = vadd.f32 %v520, %v529
      %v537 = vadd.f32 %v524, %v529
      %546 = vrot.lane.b32.xlu0 %v530, 64
      %v547 = vpop.permute.xlu0 %546
      %548 = vrot.lane.b32.xlu0 %v531, 64
      %v549 = vpop.permute.xlu0 %548
      %550 = vrot.lane.b32.xlu0 %v532, 64
      %v551 = vpop.permute.xlu0 %550
      %552 = vrot.lane.b32.xlu0 %v533, 64
      %v553 = vpop.permute.xlu0 %552
      %554 = vrot.lane.b32.xlu0 %v534, 64
      %v555 = vpop.permute.xlu0 %554
      %556 = vrot.lane.b32.xlu0 %v535, 64
      %v557 = vpop.permute.xlu0 %556
      %558 = vrot.lane.b32.xlu0 %v536, 64
      %v559 = vpop.permute.xlu0 %558
      %560 = vrot.lane.b32.xlu0 %v537, 64
      %v561 = vpop.permute.xlu0 %560
      %vm570 = vcmask 523264
      %v571 = vsel %vm570, %v486, %v547
      %v572 = vsel %vm570, %v487, %v549
      %v573 = vsel %vm570, %v488, %v551
      %v574 = vsel %vm570, %v489, %v553
      %v575 = vsel %vm570, %v490, %v555
      %v576 = vsel %vm570, %v491, %v557
      %v577 = vsel %vm570, %v492, %v559
      %v578 = vsel %vm570, %v493, %v561
      %587 = vrot.lane.b32.xlu0 %v226, 64
      %v588 = vpop.permute.xlu0 %587
      %589 = vrot.lane.b32.xlu0 %v227, 64
      %v590 = vpop.permute.xlu0 %589
      %591 = vrot.lane.b32.xlu0 %v228, 64
      %v592 = vpop.permute.xlu0 %591
      %593 = vrot.lane.b32.xlu0 %v229, 64
      %v594 = vpop.permute.xlu0 %593
      %595 = vrot.lane.b32.xlu0 %v230, 64
      %v596 = vpop.permute.xlu0 %595
      %597 = vrot.lane.b32.xlu0 %v231, 64
      %v598 = vpop.permute.xlu0 %597
      %599 = vrot.lane.b32.xlu0 %v232, 64
      %v600 = vpop.permute.xlu0 %599
      %601 = vrot.lane.b32.xlu0 %v233, 64
      %v602 = vpop.permute.xlu0 %601
      %v611 = vsel %vm570, %v226, %v588
      %v612 = vsel %vm570, %v227, %v590
      %v613 = vsel %vm570, %v228, %v592
      %v614 = vsel %vm570, %v229, %v594
      %v615 = vsel %vm570, %v230, %v596
      %v616 = vsel %vm570, %v231, %v598
      %v617 = vsel %vm570, %v232, %v600
      %v618 = vsel %vm570, %v233, %v602
      %vm619 = vcmp.gt.f32.partialorder %v611, 0.0
      %vm620 = vcmp.gt.f32.partialorder %v612, 0.0
      %vm621 = vcmp.gt.f32.partialorder %v613, 0.0
      %vm622 = vcmp.gt.f32.partialorder %v614, 0.0
      %vm623 = vcmp.gt.f32.partialorder %v615, 0.0
      %vm624 = vcmp.gt.f32.partialorder %v616, 0.0
      %vm625 = vcmp.gt.f32.partialorder %v617, 0.0
      %vm626 = vcmp.gt.f32.partialorder %v618, 0.0
      %v627 = vmul.f32 %v571, 0.2
      %v628 = vmul.f32 %v572, 0.2
      %v629 = vmul.f32 %v573, 0.2
      %v630 = vmul.f32 %v574, 0.2
      %v631 = vmul.f32 %v575, 0.2
      %v632 = vmul.f32 %v576, 0.2
      %v633 = vmul.f32 %v577, 0.2
      %v634 = vmul.f32 %v578, 0.2
      %v635 = vmax.f32 %v571, %v627
      %v636 = vmax.f32 %v572, %v628
      %v637 = vmax.f32 %v573, %v629
      %v638 = vmax.f32 %v574, %v630
      %v639 = vmax.f32 %v575, %v631
      %v640 = vmax.f32 %v576, %v632
      %v641 = vmax.f32 %v577, %v633
      %v642 = vmax.f32 %v578, %v634
      %v643 = vsel %vm619, %v635, -1e+09
      %v644 = vsel %vm620, %v636, -1e+09
      %v645 = vsel %vm621, %v637, -1e+09
      %v646 = vsel %vm622, %v638, -1e+09
      %v647 = vsel %vm623, %v639, -1e+09
      %v648 = vsel %vm624, %v640, -1e+09
      %v649 = vsel %vm625, %v641, -1e+09
      %v650 = vsel %vm626, %v642, -1e+09
      %v651 = vsel %vm570, %v643, -inf
      %652 = vmax.xlane.f32.xlu0 %v651
      %v653 = vpop.xlane.xlu0 %652
      %v654 = vsel %vm570, %v644, -inf
      %655 = vmax.xlane.f32.xlu0 %v654
      %v656 = vpop.xlane.xlu0 %655
      %v657 = vsel %vm570, %v645, -inf
      %658 = vmax.xlane.f32.xlu0 %v657
      %v659 = vpop.xlane.xlu0 %658
      %v660 = vsel %vm570, %v646, -inf
      %661 = vmax.xlane.f32.xlu0 %v660
      %v662 = vpop.xlane.xlu0 %661
      %v663 = vsel %vm570, %v647, -inf
      %664 = vmax.xlane.f32.xlu0 %v663
      %v665 = vpop.xlane.xlu0 %664
      %v666 = vsel %vm570, %v648, -inf
      %667 = vmax.xlane.f32.xlu0 %v666
      %v668 = vpop.xlane.xlu0 %667
      %v669 = vsel %vm570, %v649, -inf
      %670 = vmax.xlane.f32.xlu0 %v669
      %v671 = vpop.xlane.xlu0 %670
      %v672 = vsel %vm570, %v650, -inf
      %673 = vmax.xlane.f32.xlu0 %v672
      %v674 = vpop.xlane.xlu0 %673
      %vm675 = vcmask 1048064
      %v676 = vsel %vm675, %v643, -inf
      %677 = vmax.xlane.f32.xlu0 %v676
      %v678 = vpop.xlane.xlu0 %677
      %v679 = vsel %vm675, %v644, -inf
      %680 = vmax.xlane.f32.xlu0 %v679
      %v681 = vpop.xlane.xlu0 %680
      %v682 = vsel %vm675, %v645, -inf
      %683 = vmax.xlane.f32.xlu0 %v682
      %v684 = vpop.xlane.xlu0 %683
      %v685 = vsel %vm675, %v646, -inf
      %686 = vmax.xlane.f32.xlu0 %v685
      %v687 = vpop.xlane.xlu0 %686
      %v688 = vsel %vm675, %v647, -inf
      %689 = vmax.xlane.f32.xlu0 %v688
      %v690 = vpop.xlane.xlu0 %689
      %v691 = vsel %vm675, %v648, -inf
      %692 = vmax.xlane.f32.xlu0 %v691
      %v693 = vpop.xlane.xlu0 %692
      %v694 = vsel %vm675, %v649, -inf
      %695 = vmax.xlane.f32.xlu0 %v694
      %v696 = vpop.xlane.xlu0 %695
      %v697 = vsel %vm675, %v650, -inf
      %698 = vmax.xlane.f32.xlu0 %v697
      %v699 = vpop.xlane.xlu0 %698
      %v700 = vsel %vm570, %v653, %v678
      %v701 = vsel %vm570, %v656, %v681
      %v702 = vsel %vm570, %v659, %v684
      %v703 = vsel %vm570, %v662, %v687
      %v704 = vsel %vm570, %v665, %v690
      %v705 = vsel %vm570, %v668, %v693
      %v706 = vsel %vm570, %v671, %v696
      %v707 = vsel %vm570, %v674, %v699
      %v708 = vsub.f32 %v643, %v700
      %v709 = vsub.f32 %v644, %v701
      %v710 = vsub.f32 %v645, %v702
      %v711 = vsub.f32 %v646, %v703
      %v712 = vsub.f32 %v647, %v704
      %v713 = vsub.f32 %v648, %v705
      %v714 = vsub.f32 %v649, %v706
      %v715 = vsub.f32 %v650, %v707
      %v716 = vmul.f32 %v708, 1.442695
      %v717 = vpow.pop %v716
      %v718 = vmul.f32 %v709, 1.442695
      %v719 = vpow.pop %v718
      %v720 = vmul.f32 %v710, 1.442695
      %v721 = vpow.pop %v720
      %v722 = vmul.f32 %v711, 1.442695
      %v723 = vpow.pop %v722
      %v724 = vmul.f32 %v712, 1.442695
      %v725 = vpow.pop %v724
      %v726 = vmul.f32 %v713, 1.442695
      %v727 = vpow.pop %v726
      %v728 = vmul.f32 %v714, 1.442695
      %v729 = vpow.pop %v728
      %v730 = vmul.f32 %v715, 1.442695
      %v731 = vpow.pop %v730
      %v732 = vsel %vm570, %v717, 0.0
      %733 = vadd.xlane.f32.xlu0 %v732
      %v734 = vpop.xlane.xlu0 %733
      %v735 = vsel %vm570, %v719, 0.0
      %736 = vadd.xlane.f32.xlu0 %v735
      %v737 = vpop.xlane.xlu0 %736
      %v738 = vsel %vm570, %v721, 0.0
      %739 = vadd.xlane.f32.xlu0 %v738
      %v740 = vpop.xlane.xlu0 %739
      %v741 = vsel %vm570, %v723, 0.0
      %742 = vadd.xlane.f32.xlu0 %v741
      %v743 = vpop.xlane.xlu0 %742
      %v744 = vsel %vm570, %v725, 0.0
      %745 = vadd.xlane.f32.xlu0 %v744
      %v746 = vpop.xlane.xlu0 %745
      %v747 = vsel %vm570, %v727, 0.0
      %748 = vadd.xlane.f32.xlu0 %v747
      %v749 = vpop.xlane.xlu0 %748
      %v750 = vsel %vm570, %v729, 0.0
      %751 = vadd.xlane.f32.xlu0 %v750
      %v752 = vpop.xlane.xlu0 %751
      %v753 = vsel %vm570, %v731, 0.0
      %754 = vadd.xlane.f32.xlu0 %v753
      %v755 = vpop.xlane.xlu0 %754
      %v756 = vmax.f32 %v734, 1e-20
      %v757 = vmax.f32 %v737, 1e-20
      %v758 = vmax.f32 %v740, 1e-20
      %v759 = vmax.f32 %v743, 1e-20
      %v760 = vmax.f32 %v746, 1e-20
      %v761 = vmax.f32 %v749, 1e-20
      %v762 = vmax.f32 %v752, 1e-20
      %v763 = vmax.f32 %v755, 1e-20
      %v764 = vrcp.pop %v756
      %v765 = vrcp.pop %v757
      %v766 = vrcp.pop %v758
      %v767 = vrcp.pop %v759
      %v768 = vrcp.pop %v760
      %v769 = vrcp.pop %v761
      %v770 = vrcp.pop %v762
      %v771 = vrcp.pop %v763
      %v773 = vsel %vm570, %v717, 0
      %v776 = vsel %vm570, %v719, 0
      %v779 = vsel %vm570, %v721, 0
      %v782 = vsel %vm570, %v723, 0
      %v785 = vsel %vm570, %v725, 0
      %v788 = vsel %vm570, %v727, 0
      %v791 = vsel %vm570, %v729, 0
      %v794 = vsel %vm570, %v731, 0
      %796 = vmatprep.subr.mxu0 0.0
      %797 = vmatpush1.msra.mxu0 %v330
      %798 = vmatprep.subr.mxu0 0.0
      %799 = vmatpush1.msra.mxu0 %v335
      %800 = vmatprep.subr.mxu0 0.0
      %801 = vmatpush1.msra.mxu0 %v340
      %802 = vmatprep.subr.mxu0 0.0
      %803 = vmatpush1.msra.mxu0 %v345
      %804 = vmatprep.subr.mxu0 0.0
      %805 = vmatpush1.msra.mxu0 %v350
      %806 = vmatprep.subr.mxu0 0.0
      %807 = vmatpush1.msra.mxu0 %v355
      %808 = vmatprep.subr.mxu0 0.0
      %809 = vmatpush1.msra.mxu0 %v360
      %810 = vmatprep.subr.mxu0 0.0
      %811 = vmatpush1.msra.mxu0 %v365
      %812 = vmatprep.subr.mxu0 0.0
      %813 = vmatpush1.msra.mxu0 0.0
      %814 = vmatprep.subr.mxu0 0.0
      %815 = vmatpush1.msra.mxu0 0.0
      %816 = vmatprep.subr.mxu0 0.0
      %817 = vmatpush1.msra.mxu0 0.0
      %818 = vmatprep.subr.mxu0 0.0
      %819 = vmatpush1.msra.mxu0 0.0
      %820 = vmatprep.subr.mxu0 0.0
      %821 = vmatpush1.msra.mxu0 0.0
      %822 = vmatprep.subr.mxu0 0.0
      %823 = vmatpush1.msra.mxu0 0.0
      %824 = vmatprep.subr.mxu0 0.0
      %825 = vmatpush1.msra.mxu0 0.0
      %826 = vmatprep.subr.mxu0 0.0
      %827 = vmatpush1.msra.mxu0 0.0
      %828 = vmatprep.subr.mxu0 0.0
      %829 = vmatpush1.msra.mxu0 0.0
      %830 = vmatprep.subr.mxu0 0.0
      %831 = vmatpush1.msra.mxu0 0.0
      %832 = vmatprep.subr.mxu0 0.0
      %833 = vmatpush1.msra.mxu0 0.0
      %834 = vmatprep.subr.mxu0 0.0
      %835 = vmatpush1.msra.mxu0 0.0
      %836 = vmatprep.subr.mxu0 0.0
      %837 = vmatpush1.msra.mxu0 0.0
      %838 = vmatprep.subr.mxu0 0.0
      %839 = vmatpush1.msra.mxu0 0.0
      %840 = vmatprep.subr.mxu0 0.0
      %841 = vmatpush1.msra.mxu0 0.0
      %842 = vmatprep.subr.mxu0 0.0
      %843 = vmatpush1.msra.mxu0 0.0
      %844 = vmatprep.subr.mxu0 0.0
      %845 = vmatpush1.msra.mxu0 0.0
      %846 = vmatprep.subr.mxu0 0.0
      %847 = vmatpush1.msra.mxu0 0.0
      %848 = vmatprep.subr.mxu0 0.0
      %849 = vmatpush1.msra.mxu0 0.0
      %850 = vmatprep.subr.mxu0 0.0
      %851 = vmatpush1.msra.mxu0 0.0
      %852 = vmatprep.subr.mxu0 0.0
      %853 = vmatpush1.msra.mxu0 0.0
      %854 = vmatprep.subr.mxu0 0.0
      %855 = vmatpush1.msra.mxu0 0.0
      %856 = vmatprep.subr.mxu0 0.0
      %857 = vmatpush1.msra.mxu0 0.0
      %858 = vmatprep.subr.mxu0 0.0
      %859 = vmatpush1.msra.mxu0 0.0
      %860 = vmatprep.mubr.f32.mxu0 0.0
      %861 = vmatmul.mubr.f32.gmra.mrb[0].mxu0 %v773
      %v862 = vpop.f32.mrb[0].mxu0
      %v863 = vadd.f32 0.0, %v862
      %v864 = vpop.f32.mrb[0].mxu0
      %865 = vmatprep.mubr.f32.mxu0 0.0
      %866 = vmatmul.mubr.f32.gmra.mrb[0].mxu0 %v776
      %v867 = vpop.f32.mrb[0].mxu0
      %v868 = vadd.f32 0.0, %v867
      %v869 = vpop.f32.mrb[0].mxu0
      %870 = vmatprep.mubr.f32.mxu0 0.0
      %871 = vmatmul.mubr.f32.gmra.mrb[0].mxu0 %v779
      %v872 = vpop.f32.mrb[0].mxu0
      %v873 = vadd.f32 0.0, %v872
      %v874 = vpop.f32.mrb[0].mxu0
      %875 = vmatprep.mubr.f32.mxu0 0.0
      %876 = vmatmul.mubr.f32.gmra.mrb[0].mxu0 %v782
      %v877 = vpop.f32.mrb[0].mxu0
      %v878 = vadd.f32 0.0, %v877
      %v879 = vpop.f32.mrb[0].mxu0
      %880 = vmatprep.mubr.f32.mxu0 0.0
      %881 = vmatmul.mubr.f32.gmra.mrb[0].mxu0 %v785
      %v882 = vpop.f32.mrb[0].mxu0
      %v883 = vadd.f32 0.0, %v882
      %v884 = vpop.f32.mrb[0].mxu0
      %885 = vmatprep.mubr.f32.mxu0 0.0
      %886 = vmatmul.mubr.f32.gmra.mrb[0].mxu0 %v788
      %v887 = vpop.f32.mrb[0].mxu0
      %v888 = vadd.f32 0.0, %v887
      %v889 = vpop.f32.mrb[0].mxu0
      %890 = vmatprep.mubr.f32.mxu0 0.0
      %891 = vmatmul.mubr.f32.gmra.mrb[0].mxu0 %v791
      %v892 = vpop.f32.mrb[0].mxu0
      %v893 = vadd.f32 0.0, %v892
      %v894 = vpop.f32.mrb[0].mxu0
      %895 = vmatprep.mubr.f32.mxu0 0.0
      %896 = vmatmul.mubr.f32.gmra.mrb[0].mxu0 %v794
      %v897 = vpop.f32.mrb[0].mxu0
      %v898 = vadd.f32 0.0, %v897
      %v899 = vpop.f32.mrb[0].mxu0
      %900 = vdwg.mxu0
      %v901 = vmul.f32 %v863, %v764
      %v902 = vmul.f32 %v868, %v765
      %v903 = vmul.f32 %v873, %v766
      %v904 = vmul.f32 %v878, %v767
      %v905 = vmul.f32 %v883, %v768
      %v906 = vmul.f32 %v888, %v769
      %v907 = vmul.f32 %v893, %v770
      %v908 = vmul.f32 %v898, %v771
      %vm909 = vcmp.gt.f32.partialorder %v901, 0.0
      %vm910 = vcmp.gt.f32.partialorder %v902, 0.0
      %vm911 = vcmp.gt.f32.partialorder %v903, 0.0
      %vm912 = vcmp.gt.f32.partialorder %v904, 0.0
      %vm913 = vcmp.gt.f32.partialorder %v905, 0.0
      %vm914 = vcmp.gt.f32.partialorder %v906, 0.0
      %vm915 = vcmp.gt.f32.partialorder %v907, 0.0
      %vm916 = vcmp.gt.f32.partialorder %v908, 0.0
      %v917 = vmul.f32 %v901, 1.442695
      %v918 = vpow.pop %v917
      %v919 = vmul.f32 %v902, 1.442695
      %v920 = vpow.pop %v919
      %v921 = vmul.f32 %v903, 1.442695
      %v922 = vpow.pop %v921
      %v923 = vmul.f32 %v904, 1.442695
      %v924 = vpow.pop %v923
      %v925 = vmul.f32 %v905, 1.442695
      %v926 = vpow.pop %v925
      %v927 = vmul.f32 %v906, 1.442695
      %v928 = vpow.pop %v927
      %v929 = vmul.f32 %v907, 1.442695
      %v930 = vpow.pop %v929
      %v931 = vmul.f32 %v908, 1.442695
      %v932 = vpow.pop %v931
      %v933 = vsub.f32 %v918, 1.0
      %v934 = vsub.f32 %v920, 1.0
      %v935 = vsub.f32 %v922, 1.0
      %v936 = vsub.f32 %v924, 1.0
      %v937 = vsub.f32 %v926, 1.0
      %v938 = vsub.f32 %v928, 1.0
      %v939 = vsub.f32 %v930, 1.0
      %v940 = vsub.f32 %v932, 1.0
      %v941 = vsel %vm909, %v901, %v933
      %v942 = vsel %vm910, %v902, %v934
      %v943 = vsel %vm911, %v903, %v935
      %v944 = vsel %vm912, %v904, %v936
      %v945 = vsel %vm913, %v905, %v937
      %v946 = vsel %vm914, %v906, %v938
      %v947 = vsel %vm915, %v907, %v939
      %v948 = vsel %vm916, %v908, %v940
      %vm949 = vcmask 130048
      %950 = vst.msk [vmem:[%s217] sm:$0xff] %vm949, %v941
      %951 = vst.msk [vmem:[%s217 + $0x8] sm:$0xff] %vm949, %v942
      %952 = vst.msk [vmem:[%s217 + $0x10] sm:$0xff] %vm949, %v943
      %953 = vst.msk [vmem:[%s217 + $0x18] sm:$0xff] %vm949, %v944
      %954 = vst.msk [vmem:[%s217 + $0x20] sm:$0xff] %vm949, %v945
      %955 = vst.msk [vmem:[%s217 + $0x28] sm:$0xff] %vm949, %v946
      %956 = vst.msk [vmem:[%s217 + $0x30] sm:$0xff] %vm949, %v947
      %957 = vst.msk [vmem:[%s217 + $0x38] sm:$0xff] %vm949, %v948
      %v958 = vmul.f32 %v941, %v941
      %v959 = vmul.f32 %v942, %v942
      %v960 = vmul.f32 %v943, %v943
      %v961 = vmul.f32 %v944, %v944
      %v962 = vmul.f32 %v945, %v945
      %v963 = vmul.f32 %v946, %v946
      %v964 = vmul.f32 %v947, %v947
      %v965 = vmul.f32 %v948, %v948
      %v966 = vsel %vm949, %v958, 0.0
      %967 = vadd.xlane.f32.xlu0 %v966
      %v968 = vpop.xlane.xlu0 %967
      %v969 = vsel %vm949, %v959, 0.0
      %970 = vadd.xlane.f32.xlu0 %v969
      %v971 = vpop.xlane.xlu0 %970
      %v972 = vsel %vm949, %v960, 0.0
      %973 = vadd.xlane.f32.xlu0 %v972
      %v974 = vpop.xlane.xlu0 %973
      %v975 = vsel %vm949, %v961, 0.0
      %976 = vadd.xlane.f32.xlu0 %v975
      %v977 = vpop.xlane.xlu0 %976
      %v978 = vsel %vm949, %v962, 0.0
      %979 = vadd.xlane.f32.xlu0 %v978
      %v980 = vpop.xlane.xlu0 %979
      %v981 = vsel %vm949, %v963, 0.0
      %982 = vadd.xlane.f32.xlu0 %v981
      %v983 = vpop.xlane.xlu0 %982
      %v984 = vsel %vm949, %v964, 0.0
      %985 = vadd.xlane.f32.xlu0 %v984
      %v986 = vpop.xlane.xlu0 %985
      %v987 = vsel %vm949, %v965, 0.0
      %988 = vadd.xlane.f32.xlu0 %v987
      %v989 = vpop.xlane.xlu0 %988
      %v990 = vadd.f32 %v968, 0.0
      %v991 = vadd.f32 %v971, 0.0
      %v992 = vadd.f32 %v974, 0.0
      %v993 = vadd.f32 %v977, 0.0
      %v994 = vadd.f32 %v980, 0.0
      %v995 = vadd.f32 %v983, 0.0
      %v996 = vadd.f32 %v986, 0.0
      %v997 = vadd.f32 %v989, 0.0
      %998 = vrot.lane.b32.xlu0 %v717, 64
      %v999 = vpop.permute.xlu0 %998
      %1000 = vrot.lane.b32.xlu0 %v719, 64
      %v1001 = vpop.permute.xlu0 %1000
      %1002 = vrot.lane.b32.xlu0 %v721, 64
      %v1003 = vpop.permute.xlu0 %1002
      %1004 = vrot.lane.b32.xlu0 %v723, 64
      %v1005 = vpop.permute.xlu0 %1004
      %1006 = vrot.lane.b32.xlu0 %v725, 64
      %v1007 = vpop.permute.xlu0 %1006
      %1008 = vrot.lane.b32.xlu0 %v727, 64
      %v1009 = vpop.permute.xlu0 %1008
      %1010 = vrot.lane.b32.xlu0 %v729, 64
      %v1011 = vpop.permute.xlu0 %1010
      %1012 = vrot.lane.b32.xlu0 %v731, 64
      %v1013 = vpop.permute.xlu0 %1012
      %v1022 = vsel %vm570, %v999, 0.0
      %1023 = vadd.xlane.f32.xlu0 %v1022
      %v1024 = vpop.xlane.xlu0 %1023
      %v1025 = vsel %vm570, %v1001, 0.0
      %1026 = vadd.xlane.f32.xlu0 %v1025
      %v1027 = vpop.xlane.xlu0 %1026
      %v1028 = vsel %vm570, %v1003, 0.0
      %1029 = vadd.xlane.f32.xlu0 %v1028
      %v1030 = vpop.xlane.xlu0 %1029
      %v1031 = vsel %vm570, %v1005, 0.0
      %1032 = vadd.xlane.f32.xlu0 %v1031
      %v1033 = vpop.xlane.xlu0 %1032
      %v1034 = vsel %vm570, %v1007, 0.0
      %1035 = vadd.xlane.f32.xlu0 %v1034
      %v1036 = vpop.xlane.xlu0 %1035
      %v1037 = vsel %vm570, %v1009, 0.0
      %1038 = vadd.xlane.f32.xlu0 %v1037
      %v1039 = vpop.xlane.xlu0 %1038
      %v1040 = vsel %vm570, %v1011, 0.0
      %1041 = vadd.xlane.f32.xlu0 %v1040
      %v1042 = vpop.xlane.xlu0 %1041
      %v1043 = vsel %vm570, %v1013, 0.0
      %1044 = vadd.xlane.f32.xlu0 %v1043
      %v1045 = vpop.xlane.xlu0 %1044
      %v1046 = vmax.f32 %v1024, 1e-20
      %v1047 = vmax.f32 %v1027, 1e-20
      %v1048 = vmax.f32 %v1030, 1e-20
      %v1049 = vmax.f32 %v1033, 1e-20
      %v1050 = vmax.f32 %v1036, 1e-20
      %v1051 = vmax.f32 %v1039, 1e-20
      %v1052 = vmax.f32 %v1042, 1e-20
      %v1053 = vmax.f32 %v1045, 1e-20
      %v1054 = vrcp.pop %v1046
      %v1055 = vrcp.pop %v1047
      %v1056 = vrcp.pop %v1048
      %v1057 = vrcp.pop %v1049
      %v1058 = vrcp.pop %v1050
      %v1059 = vrcp.pop %v1051
      %v1060 = vrcp.pop %v1052
      %v1061 = vrcp.pop %v1053
      %1062 = vrot.lane.b32.xlu0 %v330, 112
      %v1063 = vpop.permute.xlu0 %1062
      %1064 = vrot.lane.b32.xlu0 %v335, 112
      %v1065 = vpop.permute.xlu0 %1064
      %1066 = vrot.lane.b32.xlu0 %v340, 112
      %v1067 = vpop.permute.xlu0 %1066
      %1068 = vrot.lane.b32.xlu0 %v345, 112
      %v1069 = vpop.permute.xlu0 %1068
      %1070 = vrot.lane.b32.xlu0 %v350, 112
      %v1071 = vpop.permute.xlu0 %1070
      %1072 = vrot.lane.b32.xlu0 %v355, 112
      %v1073 = vpop.permute.xlu0 %1072
      %1074 = vrot.lane.b32.xlu0 %v360, 112
      %v1075 = vpop.permute.xlu0 %1074
      %1076 = vrot.lane.b32.xlu0 %v365, 112
      %v1077 = vpop.permute.xlu0 %1076
      %v1086 = vsel %vm570, %v999, 0
      %v1088 = vsel %vm570, %v1001, 0
      %v1090 = vsel %vm570, %v1003, 0
      %v1092 = vsel %vm570, %v1005, 0
      %v1094 = vsel %vm570, %v1007, 0
      %v1096 = vsel %vm570, %v1009, 0
      %v1098 = vsel %vm570, %v1011, 0
      %v1100 = vsel %vm570, %v1013, 0
      %1102 = vmatprep.subr.mxu0 0.0
      %1103 = vmatpush1.msra.mxu0 %v1063
      %1104 = vmatprep.subr.mxu0 0.0
      %1105 = vmatpush1.msra.mxu0 %v1065
      %1106 = vmatprep.subr.mxu0 0.0
      %1107 = vmatpush1.msra.mxu0 %v1067
      %1108 = vmatprep.subr.mxu0 0.0
      %1109 = vmatpush1.msra.mxu0 %v1069
      %1110 = vmatprep.subr.mxu0 0.0
      %1111 = vmatpush1.msra.mxu0 %v1071
      %1112 = vmatprep.subr.mxu0 0.0
      %1113 = vmatpush1.msra.mxu0 %v1073
      %1114 = vmatprep.subr.mxu0 0.0
      %1115 = vmatpush1.msra.mxu0 %v1075
      %1116 = vmatprep.subr.mxu0 0.0
      %1117 = vmatpush1.msra.mxu0 %v1077
      %1118 = vmatprep.subr.mxu0 0.0
      %1119 = vmatpush1.msra.mxu0 0.0
      %1120 = vmatprep.subr.mxu0 0.0
      %1121 = vmatpush1.msra.mxu0 0.0
      %1122 = vmatprep.subr.mxu0 0.0
      %1123 = vmatpush1.msra.mxu0 0.0
      %1124 = vmatprep.subr.mxu0 0.0
      %1125 = vmatpush1.msra.mxu0 0.0
      %1126 = vmatprep.subr.mxu0 0.0
      %1127 = vmatpush1.msra.mxu0 0.0
      %1128 = vmatprep.subr.mxu0 0.0
      %1129 = vmatpush1.msra.mxu0 0.0
      %1130 = vmatprep.subr.mxu0 0.0
      %1131 = vmatpush1.msra.mxu0 0.0
      %1132 = vmatprep.subr.mxu0 0.0
      %1133 = vmatpush1.msra.mxu0 0.0
      %1134 = vmatprep.subr.mxu0 0.0
      %1135 = vmatpush1.msra.mxu0 0.0
      %1136 = vmatprep.subr.mxu0 0.0
      %1137 = vmatpush1.msra.mxu0 0.0
      %1138 = vmatprep.subr.mxu0 0.0
      %1139 = vmatpush1.msra.mxu0 0.0
      %1140 = vmatprep.subr.mxu0 0.0
      %1141 = vmatpush1.msra.mxu0 0.0
      %1142 = vmatprep.subr.mxu0 0.0
      %1143 = vmatpush1.msra.mxu0 0.0
      %1144 = vmatprep.subr.mxu0 0.0
      %1145 = vmatpush1.msra.mxu0 0.0
      %1146 = vmatprep.subr.mxu0 0.0
      %1147 = vmatpush1.msra.mxu0 0.0
      %1148 = vmatprep.subr.mxu0 0.0
      %1149 = vmatpush1.msra.mxu0 0.0
      %1150 = vmatprep.subr.mxu0 0.0
      %1151 = vmatpush1.msra.mxu0 0.0
      %1152 = vmatprep.subr.mxu0 0.0
      %1153 = vmatpush1.msra.mxu0 0.0
      %1154 = vmatprep.subr.mxu0 0.0
      %1155 = vmatpush1.msra.mxu0 0.0
      %1156 = vmatprep.subr.mxu0 0.0
      %1157 = vmatpush1.msra.mxu0 0.0
      %1158 = vmatprep.subr.mxu0 0.0
      %1159 = vmatpush1.msra.mxu0 0.0
      %1160 = vmatprep.subr.mxu0 0.0
      %1161 = vmatpush1.msra.mxu0 0.0
      %1162 = vmatprep.subr.mxu0 0.0
      %1163 = vmatpush1.msra.mxu0 0.0
      %1164 = vmatprep.subr.mxu0 0.0
      %1165 = vmatpush1.msra.mxu0 0.0
      %1166 = vmatprep.mubr.f32.mxu0 0.0
      %1167 = vmatmul.mubr.f32.gmra.mrb[0].mxu0 %v1086
      %v1168 = vpop.f32.mrb[0].mxu0
      %v1169 = vadd.f32 0.0, %v1168
      %v1170 = vpop.f32.mrb[0].mxu0
      %1171 = vmatprep.mubr.f32.mxu0 0.0
      %1172 = vmatmul.mubr.f32.gmra.mrb[0].mxu0 %v1088
      %v1173 = vpop.f32.mrb[0].mxu0
      %v1174 = vadd.f32 0.0, %v1173
      %v1175 = vpop.f32.mrb[0].mxu0
      %1176 = vmatprep.mubr.f32.mxu0 0.0
      %1177 = vmatmul.mubr.f32.gmra.mrb[0].mxu0 %v1090
      %v1178 = vpop.f32.mrb[0].mxu0
      %v1179 = vadd.f32 0.0, %v1178
      %v1180 = vpop.f32.mrb[0].mxu0
      %1181 = vmatprep.mubr.f32.mxu0 0.0
      %1182 = vmatmul.mubr.f32.gmra.mrb[0].mxu0 %v1092
      %v1183 = vpop.f32.mrb[0].mxu0
      %v1184 = vadd.f32 0.0, %v1183
      %v1185 = vpop.f32.mrb[0].mxu0
      %1186 = vmatprep.mubr.f32.mxu0 0.0
      %1187 = vmatmul.mubr.f32.gmra.mrb[0].mxu0 %v1094
      %v1188 = vpop.f32.mrb[0].mxu0
      %v1189 = vadd.f32 0.0, %v1188
      %v1190 = vpop.f32.mrb[0].mxu0
      %1191 = vmatprep.mubr.f32.mxu0 0.0
      %1192 = vmatmul.mubr.f32.gmra.mrb[0].mxu0 %v1096
      %v1193 = vpop.f32.mrb[0].mxu0
      %v1194 = vadd.f32 0.0, %v1193
      %v1195 = vpop.f32.mrb[0].mxu0
      %1196 = vmatprep.mubr.f32.mxu0 0.0
      %1197 = vmatmul.mubr.f32.gmra.mrb[0].mxu0 %v1098
      %v1198 = vpop.f32.mrb[0].mxu0
      %v1199 = vadd.f32 0.0, %v1198
      %v1200 = vpop.f32.mrb[0].mxu0
      %1201 = vmatprep.mubr.f32.mxu0 0.0
      %1202 = vmatmul.mubr.f32.gmra.mrb[0].mxu0 %v1100
      %v1203 = vpop.f32.mrb[0].mxu0
      %v1204 = vadd.f32 0.0, %v1203
      %v1205 = vpop.f32.mrb[0].mxu0
      %1206 = vdwg.mxu0
      %v1207 = vmul.f32 %v1169, %v1054
      %v1208 = vmul.f32 %v1174, %v1055
      %v1209 = vmul.f32 %v1179, %v1056
      %v1210 = vmul.f32 %v1184, %v1057
      %v1211 = vmul.f32 %v1189, %v1058
      %v1212 = vmul.f32 %v1194, %v1059
      %v1213 = vmul.f32 %v1199, %v1060
      %v1214 = vmul.f32 %v1204, %v1061
      %vm1215 = vcmp.gt.f32.partialorder %v1207, 0.0
      %vm1216 = vcmp.gt.f32.partialorder %v1208, 0.0
      %vm1217 = vcmp.gt.f32.partialorder %v1209, 0.0
      %vm1218 = vcmp.gt.f32.partialorder %v1210, 0.0
      %vm1219 = vcmp.gt.f32.partialorder %v1211, 0.0
      %vm1220 = vcmp.gt.f32.partialorder %v1212, 0.0
      %vm1221 = vcmp.gt.f32.partialorder %v1213, 0.0
      %vm1222 = vcmp.gt.f32.partialorder %v1214, 0.0
      %v1223 = vmul.f32 %v1207, 1.442695
      %v1224 = vpow.pop %v1223
      %v1225 = vmul.f32 %v1208, 1.442695
      %v1226 = vpow.pop %v1225
      %v1227 = vmul.f32 %v1209, 1.442695
      %v1228 = vpow.pop %v1227
      %v1229 = vmul.f32 %v1210, 1.442695
      %v1230 = vpow.pop %v1229
      %v1231 = vmul.f32 %v1211, 1.442695
      %v1232 = vpow.pop %v1231
      %v1233 = vmul.f32 %v1212, 1.442695
      %v1234 = vpow.pop %v1233
      %v1235 = vmul.f32 %v1213, 1.442695
      %v1236 = vpow.pop %v1235
      %v1237 = vmul.f32 %v1214, 1.442695
      %v1238 = vpow.pop %v1237
      %v1239 = vsub.f32 %v1224, 1.0
      %v1240 = vsub.f32 %v1226, 1.0
      %v1241 = vsub.f32 %v1228, 1.0
      %v1242 = vsub.f32 %v1230, 1.0
      %v1243 = vsub.f32 %v1232, 1.0
      %v1244 = vsub.f32 %v1234, 1.0
      %v1245 = vsub.f32 %v1236, 1.0
      %v1246 = vsub.f32 %v1238, 1.0
      %v1247 = vsel %vm1215, %v1207, %v1239
      %v1248 = vsel %vm1216, %v1208, %v1240
      %v1249 = vsel %vm1217, %v1209, %v1241
      %v1250 = vsel %vm1218, %v1210, %v1242
      %v1251 = vsel %vm1219, %v1211, %v1243
      %v1252 = vsel %vm1220, %v1212, %v1244
      %v1253 = vsel %vm1221, %v1213, %v1245
      %v1254 = vsel %vm1222, %v1214, %v1246
      %1263 = vrot.lane.b32.xlu0 %v1247, 16
      %v1264 = vpop.permute.xlu0 %1263
      %1265 = vrot.lane.b32.xlu0 %v1248, 16
      %v1266 = vpop.permute.xlu0 %1265
      %1267 = vrot.lane.b32.xlu0 %v1249, 16
      %v1268 = vpop.permute.xlu0 %1267
      %1269 = vrot.lane.b32.xlu0 %v1250, 16
      %v1270 = vpop.permute.xlu0 %1269
      %1271 = vrot.lane.b32.xlu0 %v1251, 16
      %v1272 = vpop.permute.xlu0 %1271
      %1273 = vrot.lane.b32.xlu0 %v1252, 16
      %v1274 = vpop.permute.xlu0 %1273
      %1275 = vrot.lane.b32.xlu0 %v1253, 16
      %v1276 = vpop.permute.xlu0 %1275
      %1277 = vrot.lane.b32.xlu0 %v1254, 16
      %v1278 = vpop.permute.xlu0 %1277
      %vm1287 = vcmask 261248
      %1288 = vst.msk [vmem:[%s217] sm:$0xff] %vm1287, %v1264
      %1289 = vst.msk [vmem:[%s217 + $0x8] sm:$0xff] %vm1287, %v1266
      %1290 = vst.msk [vmem:[%s217 + $0x10] sm:$0xff] %vm1287, %v1268
      %1291 = vst.msk [vmem:[%s217 + $0x18] sm:$0xff] %vm1287, %v1270
      %1292 = vst.msk [vmem:[%s217 + $0x20] sm:$0xff] %vm1287, %v1272
      %1293 = vst.msk [vmem:[%s217 + $0x28] sm:$0xff] %vm1287, %v1274
      %1294 = vst.msk [vmem:[%s217 + $0x30] sm:$0xff] %vm1287, %v1276
      %1295 = vst.msk [vmem:[%s217 + $0x38] sm:$0xff] %vm1287, %v1278
      %v1296 = vmul.f32 %v1247, %v1247
      %v1297 = vmul.f32 %v1248, %v1248
      %v1298 = vmul.f32 %v1249, %v1249
      %v1299 = vmul.f32 %v1250, %v1250
      %v1300 = vmul.f32 %v1251, %v1251
      %v1301 = vmul.f32 %v1252, %v1252
      %v1302 = vmul.f32 %v1253, %v1253
      %v1303 = vmul.f32 %v1254, %v1254
      %v1304 = vsel %vm949, %v1296, 0.0
      %1305 = vadd.xlane.f32.xlu0 %v1304
      %v1306 = vpop.xlane.xlu0 %1305
      %v1307 = vsel %vm949, %v1297, 0.0
      %1308 = vadd.xlane.f32.xlu0 %v1307
      %v1309 = vpop.xlane.xlu0 %1308
      %v1310 = vsel %vm949, %v1298, 0.0
      %1311 = vadd.xlane.f32.xlu0 %v1310
      %v1312 = vpop.xlane.xlu0 %1311
      %v1313 = vsel %vm949, %v1299, 0.0
      %1314 = vadd.xlane.f32.xlu0 %v1313
      %v1315 = vpop.xlane.xlu0 %1314
      %v1316 = vsel %vm949, %v1300, 0.0
      %1317 = vadd.xlane.f32.xlu0 %v1316
      %v1318 = vpop.xlane.xlu0 %1317
      %v1319 = vsel %vm949, %v1301, 0.0
      %1320 = vadd.xlane.f32.xlu0 %v1319
      %v1321 = vpop.xlane.xlu0 %1320
      %v1322 = vsel %vm949, %v1302, 0.0
      %1323 = vadd.xlane.f32.xlu0 %v1322
      %v1324 = vpop.xlane.xlu0 %1323
      %v1325 = vsel %vm949, %v1303, 0.0
      %1326 = vadd.xlane.f32.xlu0 %v1325
      %v1327 = vpop.xlane.xlu0 %1326
      %v1328 = vadd.f32 %v990, %v1306
      %v1329 = vadd.f32 %v991, %v1309
      %v1330 = vadd.f32 %v992, %v1312
      %v1331 = vadd.f32 %v993, %v1315
      %v1332 = vadd.f32 %v994, %v1318
      %v1333 = vadd.f32 %v995, %v1321
      %v1334 = vadd.f32 %v996, %v1324
      %v1335 = vadd.f32 %v997, %v1327
      %v1336 = vmax.f32 %v1328, 1e-24
      %v1337 = vmax.f32 %v1329, 1e-24
      %v1338 = vmax.f32 %v1330, 1e-24
      %v1339 = vmax.f32 %v1331, 1e-24
      %v1340 = vmax.f32 %v1332, 1e-24
      %v1341 = vmax.f32 %v1333, 1e-24
      %v1342 = vmax.f32 %v1334, 1e-24
      %v1343 = vmax.f32 %v1335, 1e-24
      %v1344 = vrsqrt.pop %v1336
      %v1345 = vrsqrt.pop %v1337
      %v1346 = vrsqrt.pop %v1338
      %v1347 = vrsqrt.pop %v1339
      %v1348 = vrsqrt.pop %v1340
      %v1349 = vrsqrt.pop %v1341
      %v1350 = vrsqrt.pop %v1342
      %v1351 = vrsqrt.pop %v1343
      %v1352 = vld [vmem:[%s217] sm:$0xff]
      %v1353 = vld [vmem:[%s217 + $0x8] sm:$0xff]
      %v1354 = vld [vmem:[%s217 + $0x10] sm:$0xff]
      %v1355 = vld [vmem:[%s217 + $0x18] sm:$0xff]
      %v1356 = vld [vmem:[%s217 + $0x20] sm:$0xff]
      %v1357 = vld [vmem:[%s217 + $0x28] sm:$0xff]
      %v1358 = vld [vmem:[%s217 + $0x30] sm:$0xff]
      %v1359 = vld [vmem:[%s217 + $0x38] sm:$0xff]
      %v1360 = vmul.f32 %v1352, %v1344
      %v1361 = vmul.f32 %v1353, %v1345
      %v1362 = vmul.f32 %v1354, %v1346
      %v1363 = vmul.f32 %v1355, %v1347
      %v1364 = vmul.f32 %v1356, %v1348
      %v1365 = vmul.f32 %v1357, %v1349
      %v1366 = vmul.f32 %v1358, %v1350
      %v1367 = vmul.f32 %v1359, %v1351
      %1368 = vst.msk [vmem:[%s217] sm:$0xff] %vm238, %v1360
      %1369 = vst.msk [vmem:[%s217 + $0x8] sm:$0xff] %vm238, %v1361
      %1370 = vst.msk [vmem:[%s217 + $0x10] sm:$0xff] %vm238, %v1362
      %1371 = vst.msk [vmem:[%s217 + $0x18] sm:$0xff] %vm238, %v1363
      %1372 = vst.msk [vmem:[%s217 + $0x20] sm:$0xff] %vm238, %v1364
      %1373 = vst.msk [vmem:[%s217 + $0x28] sm:$0xff] %vm238, %v1365
      %1374 = vst.msk [vmem:[%s217 + $0x30] sm:$0xff] %vm238, %v1366
      %1375 = vst.msk [vmem:[%s217 + $0x38] sm:$0xff] %vm238, %v1367
      %p1376 = scmp.lt.s32.totalorder %s15, 7
      %s1377 = scalar_select %p1376, %s15, 7
      %s1378 = smul.addr %s1377, 8
      %s1379 = smul.addr %s1378, 8
      %s1380 = scalar_lea.vmem %s4, %s1379
      // Predicated region
      $region37: #{tpu_custom_call.1} parent=35 // pred_check
        %p1381 = pneg %p127
      $region38: #{tpu_custom_call.1} parent=35 // pred_check_branch
        %1383 = sbr.rel (%p1381) target = $region40
      $region39: #{tpu_custom_call.1} parent=35 // pred_region
        _
      $region40: #{tpu_custom_call.1} parent=35 // pred_fallthru
        _
    $region36: #{tpu_custom_call.1} parent=5 // pred_fallthru
      _
    %p1384 = scmp.le.s32.totalorder 2, %s10
    // Predicated region
    $region41: #{tpu_custom_call.1} parent=5 // pred_check
      %p1385 = pneg %p1384
    $region42: #{tpu_custom_call.1} parent=5 // pred_check_branch
      %1387 = sbr.rel (%p1385) target = $region44
    $region43: #{tpu_custom_call.1} parent=5 // pred_region
      %s1388 = ssub.s32 %s10, 2
      // Predicated region
      $region45: #{tpu_custom_call.1} parent=43 // pred_check
        %p1389 = pneg %p133
      $region46: #{tpu_custom_call.1} parent=43 // pred_check_branch
        %1391 = sbr.rel (%p1389) target = $region48
      $region47: #{tpu_custom_call.1} parent=43 // pred_region
        %p1392 = scmp.lt.s32.totalorder %s16, 7
        %s1393 = scalar_select %p1392, %s16, 7
        %s1394 = smul.addr %s1393, 8
        %s1395 = smul.addr %s1394, 8
        %s1396 = scalar_lea.vmem %s4, %s1395
      $region48: #{tpu_custom_call.1} parent=43 // pred_fallthru
        _
    $region44: #{tpu_custom_call.1} parent=5 // pred_fallthru
      _
  $region6: #{tpu_custom_call.1} parent=0 // loop_footer
    %s14 = sadd.s32 1, %s10
  $region7: #{tpu_custom_call.1} parent=0 // loop_footer_branch
    %9 = sbr.rel target = $region3
  $region8: #{tpu_custom_call.1} parent=0 // loop_exit
    _

</llo_original>
